<compile_context>
chip_gen: v7x
topology: tpu7x:2x2x1
jax: 0.10.0
libtpu: 0.0.40
codegen_flags: <defaults>
</compile_context>

<pallas_src>
import functools

import jax
import jax.numpy as jnp
from jax import lax
from jax.experimental import pallas as pl
from jax.experimental.pallas import tpu as pltpu

# ---------------- small config (structure mirrors the PyTorch globals) -------
VOCAB_SIZE = 65
N_EMBED    = 48          # n_embed
BLOCK_SIZE = 16          # block_size (max sequence)
N_HEADS    = 6           # global n_heads hyperparameter
N_BLOCKS   = 2           # n_blocks
LN_EPS     = 1e-5

# Effect of the constructor-argument swap in Block.__init__:
HEAD_SIZE = N_HEADS                # per-head dimension  (= 6)
NUM_HEADS = N_EMBED // N_HEADS     # number of heads     (= 8)
assert NUM_HEADS * HEAD_SIZE == N_EMBED

V_PAD    = 128           # lane-dense padded vocab dim for the lm_head output
EMB_ROWS = 128           # padded rows of the stacked [tok; pos] table
assert VOCAB_SIZE + BLOCK_SIZE <= EMB_ROWS

BATCH = 2
SEQ_T = 8                # T <= BLOCK_SIZE


# ---------------- in-kernel helpers ------------------------------------------
def _layernorm(x, g, b):
    # x: (M, C), g/b: (1, C); all float32
    mu = jnp.mean(x, axis=-1, keepdims=True)
    var = jnp.mean((x - mu) ** 2, axis=-1, keepdims=True)
    return (x - mu) * lax.rsqrt(var + LN_EPS) * g + b


# ---------------- the single fused forward kernel ----------------------------
def _fused_forward_kernel(idx_ref, emb_ref, bias_ref, band_ref,
                          ln1g_ref, ln1b_ref, wq_ref, wk_ref, wv_ref,
                          wo_ref, bo_ref,
                          ln2g_ref, ln2b_ref, w1_ref, b1_ref, w2_ref, b2_ref,
                          lnfg_ref, lnfb_ref, wlm_ref, blm_ref,
                          out_ref, *, seq_t, num_heads, n_layers):
    ids = idx_ref[...]                                   # (M, 1) int32
    M = ids.shape[0]
    emb = emb_ref[...]                                   # (EMB_ROWS, C) stacked tok+pos
    emb_rows, C = emb.shape

    # ---- tok + pos embedding as ONE one-hot MXU dot (no concat, no add) -----
    col = lax.broadcasted_iota(jnp.int32, (M, emb_rows), 1)
    row = lax.broadcasted_iota(jnp.int32, (M, emb_rows), 0)
    onehot = jnp.logical_or(col == ids,
                            col == VOCAB_SIZE + row % seq_t)
    x = jnp.dot(onehot.astype(jnp.float32), emb,
                preferred_element_type=jnp.float32)      # (M, C)

    bias_all = bias_ref[...]                             # (M, H*M) additive 0/-1e30
    band = band_ref[...]                                 # (H*M, C) head band mask

    for l in range(n_layers):                            # static layer loop
        # -------- x = x + MultiheadAttention(LayerNorm1(x)), fused heads -----
        xn = _layernorm(x, ln1g_ref[l], ln1b_ref[l])
        q = jnp.dot(xn, wq_ref[l], preferred_element_type=jnp.float32)  # scale pre-folded
        k = jnp.dot(xn, wk_ref[l], preferred_element_type=jnp.float32)
        v = jnp.dot(xn, wv_ref[l], preferred_element_type=jnp.float32)

        # sublane-stacked, head-masked copies (aligned sublane concat)
        k_stack = jnp.concatenate([k] * num_heads, axis=0) * band        # (H*M, C)
        v_stack = jnp.concatenate([v] * num_heads, axis=0) * band        # (H*M, C)

        # all heads' scores in one lane-dense slab
        s = lax.dot_general(q, k_stack, (((1,), (1,)), ((), ())),
                            preferred_element_type=jnp.float32) + bias_all  # (M, H*M)
        s = s - jnp.max(s, axis=-1, keepdims=True)       # per-row constant: per-head
        e = jnp.exp(s)                                   # softmax ratios unchanged;
                                                         # masked entries underflow to 0
        num = jnp.dot(e, v_stack, preferred_element_type=jnp.float32)   # (M, C)
        den = jnp.dot(e, band, preferred_element_type=jnp.float32)      # (M, C) per-head denom
        attn = num * pl.reciprocal(den, approx=True)

        x = x + jnp.dot(attn, wo_ref[l],
                        preferred_element_type=jnp.float32) + bo_ref[l]

        # -------- x = x + Feedforward(LayerNorm2(x)) --------------------------
        xn = _layernorm(x, ln2g_ref[l], ln2b_ref[l])
        h1 = jnp.dot(xn, w1_ref[l], preferred_element_type=jnp.float32) + b1_ref[l]
        h1 = jnp.maximum(h1, 0.0)                        # ReLU
        x = x + jnp.dot(h1, w2_ref[l],
                        preferred_element_type=jnp.float32) + b2_ref[l]

    # -------- final LayerNorm + lm_head (lane-dense, V padded to 128) --------
    xn = _layernorm(x, lnfg_ref[...], lnfb_ref[...])
    out_ref[...] = jnp.dot(xn, wlm_ref[...],
                           preferred_element_type=jnp.float32) + blm_ref[...]


# ---------------- pallas_call wrapper -----------------------------------------
def _fused_call(idx_flat, p, seq_t):
    M = idx_flat.shape[0]
    kernel = functools.partial(_fused_forward_kernel, seq_t=seq_t,
                               num_heads=NUM_HEADS, n_layers=N_BLOCKS)
    operands = (idx_flat, p["emb_table"], p["bias_all"], p["band"],
                p["ln1_g"], p["ln1_b"], p["wq"], p["wk"], p["wv"],
                p["wo"], p["bo"], p["ln2_g"], p["ln2_b"],
                p["w1"], p["b1"], p["w2"], p["b2"],
                p["lnf_g"], p["lnf_b"], p["w_lm_pad"], p["b_lm_pad"])
    # No grid: every operand is a single full block, pinned in VMEM.
    return pl.pallas_call(
        kernel,
        out_shape=jax.ShapeDtypeStruct((M, V_PAD), jnp.float32),
        in_specs=[pl.BlockSpec(memory_space=pltpu.MemorySpace.VMEM)
                  for _ in operands],
        out_specs=pl.BlockSpec(memory_space=pltpu.MemorySpace.VMEM),
    )(*operands)


# ---------------- model forward (targets=None branch) -------------------------
@jax.jit
def bigram_lm_forward(idx, prepared):
    # idx: (B, T) int32; returns logits (B, T, vocab)
    B, T = idx.shape
    idx_flat = idx.reshape(B * T, 1).astype(jnp.int32)
    out = _fused_call(idx_flat, prepared, T)             # (B*T, V_PAD)
    return out[:, :VOCAB_SIZE].reshape(B, T, VOCAB_SIZE)


# ---------------- one-time host-side weight preparation -----------------------
def prepare_params(params, batch, seq_t):
    """Builds kernel-ready (padded / stacked / pre-scaled) weights ONCE,
    outside the per-call jitted path."""
    C, V = N_EMBED, VOCAB_SIZE
    M = batch * seq_t
    HM = NUM_HEADS * M

    # stacked [tok_table; pos_table], padded to a lane-dense 128-row table
    emb = jnp.zeros((EMB_ROWS, C), jnp.float32)
    emb = emb.at[:V].set(params["tok_table"])
    emb = emb.at[V:V + BLOCK_SIZE].set(params["pos_table"])

    # additive causal + batch-block-diagonal bias on flattened rows, tiled per head
    r = jnp.arange(M)
    valid = (r[:, None] // seq_t == r[None, :] // seq_t) & (r[None, :] <= r[:, None])
    bias_mm = jnp.where(valid, 0.0, -1e30).astype(jnp.float32)          # (M, M)
    bias_all = jnp.tile(bias_mm, (1, NUM_HEADS))                         # (M, H*M)

    # head band mask: stacked-row j belongs to head j//M, lane c to head c//HEAD_SIZE
    jj = jnp.arange(HM)[:, None]
    cc = jnp.arange(C)[None, :]
    band = (jj // M == cc // HEAD_SIZE).astype(jnp.float32)              # (H*M, C)

    scale = float(C) ** -0.5     # 1/sqrt(n_embed) — bug-compatible with the source
    return {
        "emb_table": emb, "bias_all": bias_all, "band": band,
        "ln1_g": params["ln1_g"], "ln1_b": params["ln1_b"],
        "wq": params["wq"] * scale,                      # scale folded into wq
        "wk": params["wk"], "wv": params["wv"],
        "wo": params["wo"], "bo": params["bo"],
        "ln2_g": params["ln2_g"], "ln2_b": params["ln2_b"],
        "w1": params["w1"], "b1": params["b1"],
        "w2": params["w2"], "b2": params["b2"],
        "lnf_g": params["lnf_g"], "lnf_b": params["lnf_b"],
        "w_lm_pad": jnp.pad(params["w_lm"], ((0, 0), (0, V_PAD - V))),
        "b_lm_pad": jnp.pad(params["b_lm"], ((0, 0), (0, V_PAD - V))),
    }


# ---------------- pure-JAX reference (for correctness check) ------------------
def _ln_ref(x, g, b):
    mu = x.mean(-1, keepdims=True)
    var = ((x - mu) ** 2).mean(-1, keepdims=True)
    return (x - mu) / jnp.sqrt(var + LN_EPS) * g + b


def reference_forward(idx, params):
    B, T = idx.shape
    x = jnp.take(params["tok_table"], idx, axis=0) + params["pos_table"][:T][None]
    C = x.shape[-1]
    mask = jnp.tril(jnp.ones((T, T), bool))
    for l in range(N_BLOCKS):
        xn = _ln_ref(x, params["ln1_g"][l], params["ln1_b"][l])
        q = xn @ params["wq"][l]
        k = xn @ params["wk"][l]
        v = xn @ params["wv"][l]
        outs = []
        for h in range(NUM_HEADS):
            lo, hi = h * HEAD_SIZE, (h + 1) * HEAD_SIZE
            s = jnp.einsum("btd,bsd->bts", q[..., lo:hi], k[..., lo:hi]) / (C ** 0.5)
            s = jnp.where(mask, s, -jnp.inf)
            w = jax.nn.softmax(s, axis=-1)
            outs.append(w @ v[..., lo:hi])
        x = x + (jnp.concatenate(outs, -1) @ params["wo"][l] + params["bo"][l])
        xn = _ln_ref(x, params["ln2_g"][l], params["ln2_b"][l])
        h_ = jnp.maximum(xn @ params["w1"][l] + params["b1"][l], 0.0)
        x = x + (h_ @ params["w2"][l] + params["b2"][l])
    xn = _ln_ref(x, params["lnf_g"], params["lnf_b"])
    return xn @ params["w_lm"] + params["b_lm"]


# ---------------- deterministic parameter init (stacked per-layer) ------------
def init_params(key):
    def nrm(k, shape, scale=0.02):
        return (scale * jax.random.normal(k, shape)).astype(jnp.float32)

    C, H, V, L = N_EMBED, 4 * N_EMBED, VOCAB_SIZE, N_BLOCKS
    keys = iter(jax.random.split(key, 16))
    params = {
        "tok_table": nrm(next(keys), (V, C)),
        "pos_table": nrm(next(keys), (BLOCK_SIZE, C)),
        # per-layer params stacked with a leading layer dim
        "ln1_g": jnp.ones((L, 1, C), jnp.float32),
        "ln1_b": jnp.zeros((L, 1, C), jnp.float32),
        "wq": nrm(next(keys), (L, C, C)),
        "wk": nrm(next(keys), (L, C, C)),
        "wv": nrm(next(keys), (L, C, C)),
        "wo": nrm(next(keys), (L, C, C)),
        "bo": nrm(next(keys), (L, 1, C)),
        "ln2_g": jnp.ones((L, 1, C), jnp.float32),
        "ln2_b": jnp.zeros((L, 1, C), jnp.float32),
        "w1": nrm(next(keys), (L, C, H)),
        "b1": nrm(next(keys), (L, 1, H)),
        "w2": nrm(next(keys), (L, H, C)),
        "b2": nrm(next(keys), (L, 1, C)),
        # final LN + lm_head
        "lnf_g": jnp.ones((1, C), jnp.float32),
        "lnf_b": jnp.zeros((1, C), jnp.float32),
        "w_lm": nrm(next(keys), (C, V)),
        "b_lm": nrm(next(keys), (1, V)),
    }
    return params


# ---------------- main ---------------------------------------------------------
if __name__ == "__main__":
    root = jax.random.PRNGKey(0)
    k_param, k_idx = jax.random.split(root)
    params = init_params(k_param)
    prepared = prepare_params(params, BATCH, SEQ_T)      # one-time, outside jit path
    idx = jax.random.randint(k_idx, (BATCH, SEQ_T), 0, VOCAB_SIZE, dtype=jnp.int32)

    logits = bigram_lm_forward(idx, prepared)
    logits = jax.block_until_ready(logits)
    assert logits.shape == (BATCH, SEQ_T, VOCAB_SIZE)

    ref = reference_forward(idx, params)
    assert jnp.allclose(logits, ref, rtol=2e-3, atol=2e-3), "mismatch vs reference"

    print("KERNEL_OK")
</pallas_src>

<mosaic_0001>
module attributes {stable_mosaic.version = 11 : i64} {
  func.func @_fused_forward_kernel(%arg0: memref<16x1xi32, #tpu.memory_space<vmem>>, %arg1: memref<128x48xf32, #tpu.memory_space<vmem>>, %arg2: memref<16x128xf32, #tpu.memory_space<vmem>>, %arg3: memref<128x48xf32, #tpu.memory_space<vmem>>, %arg4: memref<2x1x48xf32, #tpu.memory_space<vmem>>, %arg5: memref<2x1x48xf32, #tpu.memory_space<vmem>>, %arg6: memref<2x48x48xf32, #tpu.memory_space<vmem>>, %arg7: memref<2x48x48xf32, #tpu.memory_space<vmem>>, %arg8: memref<2x48x48xf32, #tpu.memory_space<vmem>>, %arg9: memref<2x48x48xf32, #tpu.memory_space<vmem>>, %arg10: memref<2x1x48xf32, #tpu.memory_space<vmem>>, %arg11: memref<2x1x48xf32, #tpu.memory_space<vmem>>, %arg12: memref<2x1x48xf32, #tpu.memory_space<vmem>>, %arg13: memref<2x48x192xf32, #tpu.memory_space<vmem>>, %arg14: memref<2x1x192xf32, #tpu.memory_space<vmem>>, %arg15: memref<2x192x48xf32, #tpu.memory_space<vmem>>, %arg16: memref<2x1x48xf32, #tpu.memory_space<vmem>>, %arg17: memref<1x48xf32, #tpu.memory_space<vmem>>, %arg18: memref<1x48xf32, #tpu.memory_space<vmem>>, %arg19: memref<48x128xf32, #tpu.memory_space<vmem>>, %arg20: memref<1x128xf32, #tpu.memory_space<vmem>>, %arg21: memref<16x128xf32, #tpu.memory_space<vmem>>) attributes {dimension_semantics = [], scalar_prefetch = 0 : i64, scratch_operands = 0 : i64, tpu.core_type = #tpu.core_type<tc>} {
    %c0 = arith.constant 0 : index
    %c0_0 = arith.constant 0 : index
    %0 = vector.load %arg0[%c0, %c0_0] : memref<16x1xi32, #tpu.memory_space<vmem>>, vector<16x1xi32>
    %c0_1 = arith.constant 0 : index
    %c0_2 = arith.constant 0 : index
    %1 = vector.load %arg1[%c0_1, %c0_2] : memref<128x48xf32, #tpu.memory_space<vmem>>, vector<128x48xf32>
    %2 = tpu.iota {dimensions = array<i32: 1>} : vector<16x128xi32>
    %3 = tpu.iota {dimensions = array<i32: 0>} : vector<16x128xi32>
    %4 = vector.broadcast %0 : vector<16x1xi32> to vector<16x128xi32>
    %5 = arith.cmpi eq, %2, %4 : vector<16x128xi32>
    %c8_i32 = arith.constant 8 : i32
    %c0_i32 = arith.constant 0 : i32
    %6 = arith.cmpi eq, %c8_i32, %c0_i32 : i32
    %c1_i32 = arith.constant 1 : i32
    %7 = arith.select %6, %c1_i32, %c8_i32 : i32
    %8 = vector.broadcast %7 : i32 to vector<16x128xi32>
    %9 = arith.remsi %3, %8 : vector<16x128xi32>
    %c0_i32_3 = arith.constant 0 : i32
    %10 = vector.broadcast %c0_i32_3 : i32 to vector<16x128xi32>
    %11 = arith.cmpi ne, %9, %10 : vector<16x128xi32>
    %c0_i32_4 = arith.constant 0 : i32
    %12 = vector.broadcast %c0_i32_4 : i32 to vector<16x128xi32>
    %13 = arith.cmpi slt, %9, %12 : vector<16x128xi32>
    %c0_i32_5 = arith.constant 0 : i32
    %14 = arith.cmpi slt, %7, %c0_i32_5 : i32
    %15 = vector.broadcast %14 : i1 to vector<16x128xi1>
    %16 = vector.broadcast %15 : vector<16x128xi1> to vector<16x128xi1>
    %17 = arith.xori %13, %16 : vector<16x128xi1>
    %18 = arith.andi %17, %11 : vector<16x128xi1>
    %19 = vector.broadcast %7 : i32 to vector<16x128xi32>
    %20 = arith.addi %9, %19 : vector<16x128xi32>
    %21 = arith.select %18, %20, %9 : vector<16x128xi1>, vector<16x128xi32>
    %c65_i32 = arith.constant 65 : i32
    %22 = vector.broadcast %c65_i32 : i32 to vector<16x128xi32>
    %23 = arith.addi %22, %21 : vector<16x128xi32>
    %24 = arith.cmpi eq, %2, %23 : vector<16x128xi32>
    %25 = arith.ori %5, %24 : vector<16x128xi1>
    %26 = arith.extui %25 : vector<16x128xi1> to vector<16x128xi32>
    %27 = arith.sitofp %26 : vector<16x128xi32> to vector<16x128xf32>
    %cst = arith.constant dense<0.000000e+00> : vector<16x48xf32>
    %28 = tpu.matmul %27, %1, %cst {dimension_numbers = #tpu.dot_dimension_numbers<[1], [0], [0], [1], [0, 0, 1, 1], [], []>} : vector<16x128xf32>, vector<128x48xf32>, vector<16x48xf32> -> vector<16x48xf32>
    %c0_6 = arith.constant 0 : index
    %c0_7 = arith.constant 0 : index
    %29 = vector.load %arg2[%c0_6, %c0_7] : memref<16x128xf32, #tpu.memory_space<vmem>>, vector<16x128xf32>
    %c0_8 = arith.constant 0 : index
    %c0_9 = arith.constant 0 : index
    %30 = vector.load %arg3[%c0_8, %c0_9] : memref<128x48xf32, #tpu.memory_space<vmem>>, vector<128x48xf32>
    %c0_10 = arith.constant 0 : index
    %c0_11 = arith.constant 0 : index
    %c0_12 = arith.constant 0 : index
    %31 = vector.load %arg4[%c0_10, %c0_11, %c0_12] : memref<2x1x48xf32, #tpu.memory_space<vmem>>, vector<1x1x48xf32>
    %32 = vector.shape_cast %31 : vector<1x1x48xf32> to vector<1x48xf32>
    %c0_13 = arith.constant 0 : index
    %c0_14 = arith.constant 0 : index
    %c0_15 = arith.constant 0 : index
    %33 = vector.load %arg5[%c0_13, %c0_14, %c0_15] : memref<2x1x48xf32, #tpu.memory_space<vmem>>, vector<1x1x48xf32>
    %34 = vector.shape_cast %33 : vector<1x1x48xf32> to vector<1x48xf32>
    %cst_16 = arith.constant dense<0.000000e+00> : vector<16xf32>
    %35 = vector.multi_reduction <add>, %28, %cst_16 [1] : vector<16x48xf32> to vector<16xf32>
    %36 = vector.shape_cast %35 : vector<16xf32> to vector<16x1xf32>
    %cst_17 = arith.constant 4.800000e+01 : f32
    %37 = vector.broadcast %cst_17 : f32 to vector<16x1xf32>
    %38 = arith.divf %36, %37 : vector<16x1xf32>
    %39 = vector.broadcast %38 : vector<16x1xf32> to vector<16x48xf32>
    %40 = arith.subf %28, %39 : vector<16x48xf32>
    %41 = arith.mulf %40, %40 : vector<16x48xf32>
    %cst_18 = arith.constant dense<0.000000e+00> : vector<16xf32>
    %42 = vector.multi_reduction <add>, %41, %cst_18 [1] : vector<16x48xf32> to vector<16xf32>
    %43 = vector.shape_cast %42 : vector<16xf32> to vector<16x1xf32>
    %cst_19 = arith.constant 4.800000e+01 : f32
    %44 = vector.broadcast %cst_19 : f32 to vector<16x1xf32>
    %45 = arith.divf %43, %44 : vector<16x1xf32>
    %46 = vector.broadcast %38 : vector<16x1xf32> to vector<16x48xf32>
    %47 = arith.subf %28, %46 : vector<16x48xf32>
    %cst_20 = arith.constant 9.99999974E-6 : f32
    %48 = vector.broadcast %cst_20 : f32 to vector<16x1xf32>
    %49 = arith.addf %45, %48 : vector<16x1xf32>
    %50 = math.rsqrt %49 : vector<16x1xf32>
    %51 = vector.broadcast %50 : vector<16x1xf32> to vector<16x48xf32>
    %52 = arith.mulf %47, %51 : vector<16x48xf32>
    %53 = vector.broadcast %32 : vector<1x48xf32> to vector<16x48xf32>
    %54 = arith.mulf %52, %53 : vector<16x48xf32>
    %55 = vector.broadcast %34 : vector<1x48xf32> to vector<16x48xf32>
    %56 = arith.addf %54, %55 : vector<16x48xf32>
    %c0_21 = arith.constant 0 : index
    %c0_22 = arith.constant 0 : index
    %c0_23 = arith.constant 0 : index
    %57 = vector.load %arg6[%c0_21, %c0_22, %c0_23] : memref<2x48x48xf32, #tpu.memory_space<vmem>>, vector<1x48x48xf32>
    %58 = vector.shape_cast %57 : vector<1x48x48xf32> to vector<48x48xf32>
    %cst_24 = arith.constant dense<0.000000e+00> : vector<16x48xf32>
    %59 = tpu.matmul %56, %58, %cst_24 {dimension_numbers = #tpu.dot_dimension_numbers<[1], [0], [0], [1], [0, 0, 1, 1], [], []>} : vector<16x48xf32>, vector<48x48xf32>, vector<16x48xf32> -> vector<16x48xf32>
    %c0_25 = arith.constant 0 : index
    %c0_26 = arith.constant 0 : index
    %c0_27 = arith.constant 0 : index
    %60 = vector.load %arg7[%c0_25, %c0_26, %c0_27] : memref<2x48x48xf32, #tpu.memory_space<vmem>>, vector<1x48x48xf32>
    %61 = vector.shape_cast %60 : vector<1x48x48xf32> to vector<48x48xf32>
    %cst_28 = arith.constant dense<0.000000e+00> : vector<16x48xf32>
    %62 = tpu.matmul %56, %61, %cst_28 {dimension_numbers = #tpu.dot_dimension_numbers<[1], [0], [0], [1], [0, 0, 1, 1], [], []>} : vector<16x48xf32>, vector<48x48xf32>, vector<16x48xf32> -> vector<16x48xf32>
    %c0_29 = arith.constant 0 : index
    %c0_30 = arith.constant 0 : index
    %c0_31 = arith.constant 0 : index
    %63 = vector.load %arg8[%c0_29, %c0_30, %c0_31] : memref<2x48x48xf32, #tpu.memory_space<vmem>>, vector<1x48x48xf32>
    %64 = vector.shape_cast %63 : vector<1x48x48xf32> to vector<48x48xf32>
    %cst_32 = arith.constant dense<0.000000e+00> : vector<16x48xf32>
    %65 = tpu.matmul %56, %64, %cst_32 {dimension_numbers = #tpu.dot_dimension_numbers<[1], [0], [0], [1], [0, 0, 1, 1], [], []>} : vector<16x48xf32>, vector<48x48xf32>, vector<16x48xf32> -> vector<16x48xf32>
    %66 = tpu.concatenate %62, %62, %62, %62, %62, %62, %62, %62 in 0 : vector<16x48xf32>, vector<16x48xf32>, vector<16x48xf32>, vector<16x48xf32>, vector<16x48xf32>, vector<16x48xf32>, vector<16x48xf32>, vector<16x48xf32> -> vector<128x48xf32>
    %67 = arith.mulf %66, %30 : vector<128x48xf32>
    %68 = tpu.concatenate %65, %65, %65, %65, %65, %65, %65, %65 in 0 : vector<16x48xf32>, vector<16x48xf32>, vector<16x48xf32>, vector<16x48xf32>, vector<16x48xf32>, vector<16x48xf32>, vector<16x48xf32>, vector<16x48xf32> -> vector<128x48xf32>
    %69 = arith.mulf %68, %30 : vector<128x48xf32>
    %cst_33 = arith.constant dense<0.000000e+00> : vector<16x128xf32>
    %70 = tpu.matmul %59, %67, %cst_33 {dimension_numbers = #tpu.dot_dimension_numbers<[1], [1], [0], [0], [0, 0, 1, 0], [], []>} : vector<16x48xf32>, vector<128x48xf32>, vector<16x128xf32> -> vector<16x128xf32>
    %71 = arith.addf %70, %29 : vector<16x128xf32>
    %cst_34 = arith.constant dense<0xFF800000> : vector<16xf32>
    %72 = vector.multi_reduction <maximumf>, %71, %cst_34 [1] : vector<16x128xf32> to vector<16xf32>
    %73 = vector.shape_cast %72 : vector<16xf32> to vector<16x1xf32>
    %74 = vector.broadcast %73 : vector<16x1xf32> to vector<16x128xf32>
    %75 = arith.subf %71, %74 : vector<16x128xf32>
    %76 = math.exp %75 : vector<16x128xf32>
    %cst_35 = arith.constant dense<0.000000e+00> : vector<16x48xf32>
    %77 = tpu.matmul %76, %69, %cst_35 {dimension_numbers = #tpu.dot_dimension_numbers<[1], [0], [0], [1], [0, 0, 1, 1], [], []>} : vector<16x128xf32>, vector<128x48xf32>, vector<16x48xf32> -> vector<16x48xf32>
    %cst_36 = arith.constant dense<0.000000e+00> : vector<16x48xf32>
    %78 = tpu.matmul %76, %30, %cst_36 {dimension_numbers = #tpu.dot_dimension_numbers<[1], [0], [0], [1], [0, 0, 1, 1], [], []>} : vector<16x128xf32>, vector<128x48xf32>, vector<16x48xf32> -> vector<16x48xf32>
    %79 = tpu.reciprocal %78 {approx = true} : vector<16x48xf32> -> vector<16x48xf32>
    %80 = arith.mulf %77, %79 : vector<16x48xf32>
    %c0_37 = arith.constant 0 : index
    %c0_38 = arith.constant 0 : index
    %c0_39 = arith.constant 0 : index
    %81 = vector.load %arg9[%c0_37, %c0_38, %c0_39] : memref<2x48x48xf32, #tpu.memory_space<vmem>>, vector<1x48x48xf32>
    %82 = vector.shape_cast %81 : vector<1x48x48xf32> to vector<48x48xf32>
    %cst_40 = arith.constant dense<0.000000e+00> : vector<16x48xf32>
    %83 = tpu.matmul %80, %82, %cst_40 {dimension_numbers = #tpu.dot_dimension_numbers<[1], [0], [0], [1], [0, 0, 1, 1], [], []>} : vector<16x48xf32>, vector<48x48xf32>, vector<16x48xf32> -> vector<16x48xf32>
    %84 = arith.addf %28, %83 : vector<16x48xf32>
    %c0_41 = arith.constant 0 : index
    %c0_42 = arith.constant 0 : index
    %c0_43 = arith.constant 0 : index
    %85 = vector.load %arg10[%c0_41, %c0_42, %c0_43] : memref<2x1x48xf32, #tpu.memory_space<vmem>>, vector<1x1x48xf32>
    %86 = vector.shape_cast %85 : vector<1x1x48xf32> to vector<1x48xf32>
    %87 = vector.broadcast %86 : vector<1x48xf32> to vector<16x48xf32>
    %88 = arith.addf %84, %87 : vector<16x48xf32>
    %c0_44 = arith.constant 0 : index
    %c0_45 = arith.constant 0 : index
    %c0_46 = arith.constant 0 : index
    %89 = vector.load %arg11[%c0_44, %c0_45, %c0_46] : memref<2x1x48xf32, #tpu.memory_space<vmem>>, vector<1x1x48xf32>
    %90 = vector.shape_cast %89 : vector<1x1x48xf32> to vector<1x48xf32>
    %c0_47 = arith.constant 0 : index
    %c0_48 = arith.constant 0 : index
    %c0_49 = arith.constant 0 : index
    %91 = vector.load %arg12[%c0_47, %c0_48, %c0_49] : memref<2x1x48xf32, #tpu.memory_space<vmem>>, vector<1x1x48xf32>
    %92 = vector.shape_cast %91 : vector<1x1x48xf32> to vector<1x48xf32>
    %cst_50 = arith.constant dense<0.000000e+00> : vector<16xf32>
    %93 = vector.multi_reduction <add>, %88, %cst_50 [1] : vector<16x48xf32> to vector<16xf32>
    %94 = vector.shape_cast %93 : vector<16xf32> to vector<16x1xf32>
    %cst_51 = arith.constant 4.800000e+01 : f32
    %95 = vector.broadcast %cst_51 : f32 to vector<16x1xf32>
    %96 = arith.divf %94, %95 : vector<16x1xf32>
    %97 = vector.broadcast %96 : vector<16x1xf32> to vector<16x48xf32>
    %98 = arith.subf %88, %97 : vector<16x48xf32>
    %99 = arith.mulf %98, %98 : vector<16x48xf32>
    %cst_52 = arith.constant dense<0.000000e+00> : vector<16xf32>
    %100 = vector.multi_reduction <add>, %99, %cst_52 [1] : vector<16x48xf32> to vector<16xf32>
    %101 = vector.shape_cast %100 : vector<16xf32> to vector<16x1xf32>
    %cst_53 = arith.constant 4.800000e+01 : f32
    %102 = vector.broadcast %cst_53 : f32 to vector<16x1xf32>
    %103 = arith.divf %101, %102 : vector<16x1xf32>
    %104 = vector.broadcast %96 : vector<16x1xf32> to vector<16x48xf32>
    %105 = arith.subf %88, %104 : vector<16x48xf32>
    %cst_54 = arith.constant 9.99999974E-6 : f32
    %106 = vector.broadcast %cst_54 : f32 to vector<16x1xf32>
    %107 = arith.addf %103, %106 : vector<16x1xf32>
    %108 = math.rsqrt %107 : vector<16x1xf32>
    %109 = vector.broadcast %108 : vector<16x1xf32> to vector<16x48xf32>
    %110 = arith.mulf %105, %109 : vector<16x48xf32>
    %111 = vector.broadcast %90 : vector<1x48xf32> to vector<16x48xf32>
    %112 = arith.mulf %110, %111 : vector<16x48xf32>
    %113 = vector.broadcast %92 : vector<1x48xf32> to vector<16x48xf32>
    %114 = arith.addf %112, %113 : vector<16x48xf32>
    %c0_55 = arith.constant 0 : index
    %c0_56 = arith.constant 0 : index
    %c0_57 = arith.constant 0 : index
    %115 = vector.load %arg13[%c0_55, %c0_56, %c0_57] : memref<2x48x192xf32, #tpu.memory_space<vmem>>, vector<1x48x192xf32>
    %116 = vector.shape_cast %115 : vector<1x48x192xf32> to vector<48x192xf32>
    %cst_58 = arith.constant dense<0.000000e+00> : vector<16x192xf32>
    %117 = tpu.matmul %114, %116, %cst_58 {dimension_numbers = #tpu.dot_dimension_numbers<[1], [0], [0], [1], [0, 0, 1, 1], [], []>} : vector<16x48xf32>, vector<48x192xf32>, vector<16x192xf32> -> vector<16x192xf32>
    %c0_59 = arith.constant 0 : index
    %c0_60 = arith.constant 0 : index
    %c0_61 = arith.constant 0 : index
    %118 = vector.load %arg14[%c0_59, %c0_60, %c0_61] : memref<2x1x192xf32, #tpu.memory_space<vmem>>, vector<1x1x192xf32>
    %119 = vector.shape_cast %118 : vector<1x1x192xf32> to vector<1x192xf32>
    %120 = vector.broadcast %119 : vector<1x192xf32> to vector<16x192xf32>
    %121 = arith.addf %117, %120 : vector<16x192xf32>
    %cst_62 = arith.constant 0.000000e+00 : f32
    %122 = vector.broadcast %cst_62 : f32 to vector<16x192xf32>
    %123 = arith.maximumf %121, %122 : vector<16x192xf32>
    %c0_63 = arith.constant 0 : index
    %c0_64 = arith.constant 0 : index
    %c0_65 = arith.constant 0 : index
    %124 = vector.load %arg15[%c0_63, %c0_64, %c0_65] : memref<2x192x48xf32, #tpu.memory_space<vmem>>, vector<1x192x48xf32>
    %125 = vector.shape_cast %124 : vector<1x192x48xf32> to vector<192x48xf32>
    %cst_66 = arith.constant dense<0.000000e+00> : vector<16x48xf32>
    %126 = tpu.matmul %123, %125, %cst_66 {dimension_numbers = #tpu.dot_dimension_numbers<[1], [0], [0], [1], [0, 0, 1, 1], [], []>} : vector<16x192xf32>, vector<192x48xf32>, vector<16x48xf32> -> vector<16x48xf32>
    %127 = arith.addf %88, %126 : vector<16x48xf32>
    %c0_67 = arith.constant 0 : index
    %c0_68 = arith.constant 0 : index
    %c0_69 = arith.constant 0 : index
    %128 = vector.load %arg16[%c0_67, %c0_68, %c0_69] : memref<2x1x48xf32, #tpu.memory_space<vmem>>, vector<1x1x48xf32>
    %129 = vector.shape_cast %128 : vector<1x1x48xf32> to vector<1x48xf32>
    %130 = vector.broadcast %129 : vector<1x48xf32> to vector<16x48xf32>
    %131 = arith.addf %127, %130 : vector<16x48xf32>
    %c1 = arith.constant 1 : index
    %c0_70 = arith.constant 0 : index
    %c0_71 = arith.constant 0 : index
    %132 = vector.load %arg4[%c1, %c0_70, %c0_71] : memref<2x1x48xf32, #tpu.memory_space<vmem>>, vector<1x1x48xf32>
    %133 = vector.shape_cast %132 : vector<1x1x48xf32> to vector<1x48xf32>
    %c1_72 = arith.constant 1 : index
    %c0_73 = arith.constant 0 : index
    %c0_74 = arith.constant 0 : index
    %134 = vector.load %arg5[%c1_72, %c0_73, %c0_74] : memref<2x1x48xf32, #tpu.memory_space<vmem>>, vector<1x1x48xf32>
    %135 = vector.shape_cast %134 : vector<1x1x48xf32> to vector<1x48xf32>
    %cst_75 = arith.constant dense<0.000000e+00> : vector<16xf32>
    %136 = vector.multi_reduction <add>, %131, %cst_75 [1] : vector<16x48xf32> to vector<16xf32>
    %137 = vector.shape_cast %136 : vector<16xf32> to vector<16x1xf32>
    %cst_76 = arith.constant 4.800000e+01 : f32
    %138 = vector.broadcast %cst_76 : f32 to vector<16x1xf32>
    %139 = arith.divf %137, %138 : vector<16x1xf32>
    %140 = vector.broadcast %139 : vector<16x1xf32> to vector<16x48xf32>
    %141 = arith.subf %131, %140 : vector<16x48xf32>
    %142 = arith.mulf %141, %141 : vector<16x48xf32>
    %cst_77 = arith.constant dense<0.000000e+00> : vector<16xf32>
    %143 = vector.multi_reduction <add>, %142, %cst_77 [1] : vector<16x48xf32> to vector<16xf32>
    %144 = vector.shape_cast %143 : vector<16xf32> to vector<16x1xf32>
    %cst_78 = arith.constant 4.800000e+01 : f32
    %145 = vector.broadcast %cst_78 : f32 to vector<16x1xf32>
    %146 = arith.divf %144, %145 : vector<16x1xf32>
    %147 = vector.broadcast %139 : vector<16x1xf32> to vector<16x48xf32>
    %148 = arith.subf %131, %147 : vector<16x48xf32>
    %cst_79 = arith.constant 9.99999974E-6 : f32
    %149 = vector.broadcast %cst_79 : f32 to vector<16x1xf32>
    %150 = arith.addf %146, %149 : vector<16x1xf32>
    %151 = math.rsqrt %150 : vector<16x1xf32>
    %152 = vector.broadcast %151 : vector<16x1xf32> to vector<16x48xf32>
    %153 = arith.mulf %148, %152 : vector<16x48xf32>
    %154 = vector.broadcast %133 : vector<1x48xf32> to vector<16x48xf32>
    %155 = arith.mulf %153, %154 : vector<16x48xf32>
    %156 = vector.broadcast %135 : vector<1x48xf32> to vector<16x48xf32>
    %157 = arith.addf %155, %156 : vector<16x48xf32>
    %c1_80 = arith.constant 1 : index
    %c0_81 = arith.constant 0 : index
    %c0_82 = arith.constant 0 : index
    %158 = vector.load %arg6[%c1_80, %c0_81, %c0_82] : memref<2x48x48xf32, #tpu.memory_space<vmem>>, vector<1x48x48xf32>
    %159 = vector.shape_cast %158 : vector<1x48x48xf32> to vector<48x48xf32>
    %cst_83 = arith.constant dense<0.000000e+00> : vector<16x48xf32>
    %160 = tpu.matmul %157, %159, %cst_83 {dimension_numbers = #tpu.dot_dimension_numbers<[1], [0], [0], [1], [0, 0, 1, 1], [], []>} : vector<16x48xf32>, vector<48x48xf32>, vector<16x48xf32> -> vector<16x48xf32>
    %c1_84 = arith.constant 1 : index
    %c0_85 = arith.constant 0 : index
    %c0_86 = arith.constant 0 : index
    %161 = vector.load %arg7[%c1_84, %c0_85, %c0_86] : memref<2x48x48xf32, #tpu.memory_space<vmem>>, vector<1x48x48xf32>
    %162 = vector.shape_cast %161 : vector<1x48x48xf32> to vector<48x48xf32>
    %cst_87 = arith.constant dense<0.000000e+00> : vector<16x48xf32>
    %163 = tpu.matmul %157, %162, %cst_87 {dimension_numbers = #tpu.dot_dimension_numbers<[1], [0], [0], [1], [0, 0, 1, 1], [], []>} : vector<16x48xf32>, vector<48x48xf32>, vector<16x48xf32> -> vector<16x48xf32>
    %c1_88 = arith.constant 1 : index
    %c0_89 = arith.constant 0 : index
    %c0_90 = arith.constant 0 : index
    %164 = vector.load %arg8[%c1_88, %c0_89, %c0_90] : memref<2x48x48xf32, #tpu.memory_space<vmem>>, vector<1x48x48xf32>
    %165 = vector.shape_cast %164 : vector<1x48x48xf32> to vector<48x48xf32>
    %cst_91 = arith.constant dense<0.000000e+00> : vector<16x48xf32>
    %166 = tpu.matmul %157, %165, %cst_91 {dimension_numbers = #tpu.dot_dimension_numbers<[1], [0], [0], [1], [0, 0, 1, 1], [], []>} : vector<16x48xf32>, vector<48x48xf32>, vector<16x48xf32> -> vector<16x48xf32>
    %167 = tpu.concatenate %163, %163, %163, %163, %163, %163, %163, %163 in 0 : vector<16x48xf32>, vector<16x48xf32>, vector<16x48xf32>, vector<16x48xf32>, vector<16x48xf32>, vector<16x48xf32>, vector<16x48xf32>, vector<16x48xf32> -> vector<128x48xf32>
    %168 = arith.mulf %167, %30 : vector<128x48xf32>
    %169 = tpu.concatenate %166, %166, %166, %166, %166, %166, %166, %166 in 0 : vector<16x48xf32>, vector<16x48xf32>, vector<16x48xf32>, vector<16x48xf32>, vector<16x48xf32>, vector<16x48xf32>, vector<16x48xf32>, vector<16x48xf32> -> vector<128x48xf32>
    %170 = arith.mulf %169, %30 : vector<128x48xf32>
    %cst_92 = arith.constant dense<0.000000e+00> : vector<16x128xf32>
    %171 = tpu.matmul %160, %168, %cst_92 {dimension_numbers = #tpu.dot_dimension_numbers<[1], [1], [0], [0], [0, 0, 1, 0], [], []>} : vector<16x48xf32>, vector<128x48xf32>, vector<16x128xf32> -> vector<16x128xf32>
    %172 = arith.addf %171, %29 : vector<16x128xf32>
    %cst_93 = arith.constant dense<0xFF800000> : vector<16xf32>
    %173 = vector.multi_reduction <maximumf>, %172, %cst_93 [1] : vector<16x128xf32> to vector<16xf32>
    %174 = vector.shape_cast %173 : vector<16xf32> to vector<16x1xf32>
    %175 = vector.broadcast %174 : vector<16x1xf32> to vector<16x128xf32>
    %176 = arith.subf %172, %175 : vector<16x128xf32>
    %177 = math.exp %176 : vector<16x128xf32>
    %cst_94 = arith.constant dense<0.000000e+00> : vector<16x48xf32>
    %178 = tpu.matmul %177, %170, %cst_94 {dimension_numbers = #tpu.dot_dimension_numbers<[1], [0], [0], [1], [0, 0, 1, 1], [], []>} : vector<16x128xf32>, vector<128x48xf32>, vector<16x48xf32> -> vector<16x48xf32>
    %cst_95 = arith.constant dense<0.000000e+00> : vector<16x48xf32>
    %179 = tpu.matmul %177, %30, %cst_95 {dimension_numbers = #tpu.dot_dimension_numbers<[1], [0], [0], [1], [0, 0, 1, 1], [], []>} : vector<16x128xf32>, vector<128x48xf32>, vector<16x48xf32> -> vector<16x48xf32>
    %180 = tpu.reciprocal %179 {approx = true} : vector<16x48xf32> -> vector<16x48xf32>
    %181 = arith.mulf %178, %180 : vector<16x48xf32>
    %c1_96 = arith.constant 1 : index
    %c0_97 = arith.constant 0 : index
    %c0_98 = arith.constant 0 : index
    %182 = vector.load %arg9[%c1_96, %c0_97, %c0_98] : memref<2x48x48xf32, #tpu.memory_space<vmem>>, vector<1x48x48xf32>
    %183 = vector.shape_cast %182 : vector<1x48x48xf32> to vector<48x48xf32>
    %cst_99 = arith.constant dense<0.000000e+00> : vector<16x48xf32>
    %184 = tpu.matmul %181, %183, %cst_99 {dimension_numbers = #tpu.dot_dimension_numbers<[1], [0], [0], [1], [0, 0, 1, 1], [], []>} : vector<16x48xf32>, vector<48x48xf32>, vector<16x48xf32> -> vector<16x48xf32>
    %185 = arith.addf %131, %184 : vector<16x48xf32>
    %c1_100 = arith.constant 1 : index
    %c0_101 = arith.constant 0 : index
    %c0_102 = arith.constant 0 : index
    %186 = vector.load %arg10[%c1_100, %c0_101, %c0_102] : memref<2x1x48xf32, #tpu.memory_space<vmem>>, vector<1x1x48xf32>
    %187 = vector.shape_cast %186 : vector<1x1x48xf32> to vector<1x48xf32>
    %188 = vector.broadcast %187 : vector<1x48xf32> to vector<16x48xf32>
    %189 = arith.addf %185, %188 : vector<16x48xf32>
    %c1_103 = arith.constant 1 : index
    %c0_104 = arith.constant 0 : index
    %c0_105 = arith.constant 0 : index
    %190 = vector.load %arg11[%c1_103, %c0_104, %c0_105] : memref<2x1x48xf32, #tpu.memory_space<vmem>>, vector<1x1x48xf32>
    %191 = vector.shape_cast %190 : vector<1x1x48xf32> to vector<1x48xf32>
    %c1_106 = arith.constant 1 : index
    %c0_107 = arith.constant 0 : index
    %c0_108 = arith.constant 0 : index
    %192 = vector.load %arg12[%c1_106, %c0_107, %c0_108] : memref<2x1x48xf32, #tpu.memory_space<vmem>>, vector<1x1x48xf32>
    %193 = vector.shape_cast %192 : vector<1x1x48xf32> to vector<1x48xf32>
    %cst_109 = arith.constant dense<0.000000e+00> : vector<16xf32>
    %194 = vector.multi_reduction <add>, %189, %cst_109 [1] : vector<16x48xf32> to vector<16xf32>
    %195 = vector.shape_cast %194 : vector<16xf32> to vector<16x1xf32>
    %cst_110 = arith.constant 4.800000e+01 : f32
    %196 = vector.broadcast %cst_110 : f32 to vector<16x1xf32>
    %197 = arith.divf %195, %196 : vector<16x1xf32>
    %198 = vector.broadcast %197 : vector<16x1xf32> to vector<16x48xf32>
    %199 = arith.subf %189, %198 : vector<16x48xf32>
    %200 = arith.mulf %199, %199 : vector<16x48xf32>
    %cst_111 = arith.constant dense<0.000000e+00> : vector<16xf32>
    %201 = vector.multi_reduction <add>, %200, %cst_111 [1] : vector<16x48xf32> to vector<16xf32>
    %202 = vector.shape_cast %201 : vector<16xf32> to vector<16x1xf32>
    %cst_112 = arith.constant 4.800000e+01 : f32
    %203 = vector.broadcast %cst_112 : f32 to vector<16x1xf32>
    %204 = arith.divf %202, %203 : vector<16x1xf32>
    %205 = vector.broadcast %197 : vector<16x1xf32> to vector<16x48xf32>
    %206 = arith.subf %189, %205 : vector<16x48xf32>
    %cst_113 = arith.constant 9.99999974E-6 : f32
    %207 = vector.broadcast %cst_113 : f32 to vector<16x1xf32>
    %208 = arith.addf %204, %207 : vector<16x1xf32>
    %209 = math.rsqrt %208 : vector<16x1xf32>
    %210 = vector.broadcast %209 : vector<16x1xf32> to vector<16x48xf32>
    %211 = arith.mulf %206, %210 : vector<16x48xf32>
    %212 = vector.broadcast %191 : vector<1x48xf32> to vector<16x48xf32>
    %213 = arith.mulf %211, %212 : vector<16x48xf32>
    %214 = vector.broadcast %193 : vector<1x48xf32> to vector<16x48xf32>
    %215 = arith.addf %213, %214 : vector<16x48xf32>
    %c1_114 = arith.constant 1 : index
    %c0_115 = arith.constant 0 : index
    %c0_116 = arith.constant 0 : index
    %216 = vector.load %arg13[%c1_114, %c0_115, %c0_116] : memref<2x48x192xf32, #tpu.memory_space<vmem>>, vector<1x48x192xf32>
    %217 = vector.shape_cast %216 : vector<1x48x192xf32> to vector<48x192xf32>
    %cst_117 = arith.constant dense<0.000000e+00> : vector<16x192xf32>
    %218 = tpu.matmul %215, %217, %cst_117 {dimension_numbers = #tpu.dot_dimension_numbers<[1], [0], [0], [1], [0, 0, 1, 1], [], []>} : vector<16x48xf32>, vector<48x192xf32>, vector<16x192xf32> -> vector<16x192xf32>
    %c1_118 = arith.constant 1 : index
    %c0_119 = arith.constant 0 : index
    %c0_120 = arith.constant 0 : index
    %219 = vector.load %arg14[%c1_118, %c0_119, %c0_120] : memref<2x1x192xf32, #tpu.memory_space<vmem>>, vector<1x1x192xf32>
    %220 = vector.shape_cast %219 : vector<1x1x192xf32> to vector<1x192xf32>
    %221 = vector.broadcast %220 : vector<1x192xf32> to vector<16x192xf32>
    %222 = arith.addf %218, %221 : vector<16x192xf32>
    %cst_121 = arith.constant 0.000000e+00 : f32
    %223 = vector.broadcast %cst_121 : f32 to vector<16x192xf32>
    %224 = arith.maximumf %222, %223 : vector<16x192xf32>
    %c1_122 = arith.constant 1 : index
    %c0_123 = arith.constant 0 : index
    %c0_124 = arith.constant 0 : index
    %225 = vector.load %arg15[%c1_122, %c0_123, %c0_124] : memref<2x192x48xf32, #tpu.memory_space<vmem>>, vector<1x192x48xf32>
    %226 = vector.shape_cast %225 : vector<1x192x48xf32> to vector<192x48xf32>
    %cst_125 = arith.constant dense<0.000000e+00> : vector<16x48xf32>
    %227 = tpu.matmul %224, %226, %cst_125 {dimension_numbers = #tpu.dot_dimension_numbers<[1], [0], [0], [1], [0, 0, 1, 1], [], []>} : vector<16x192xf32>, vector<192x48xf32>, vector<16x48xf32> -> vector<16x48xf32>
    %228 = arith.addf %189, %227 : vector<16x48xf32>
    %c1_126 = arith.constant 1 : index
    %c0_127 = arith.constant 0 : index
    %c0_128 = arith.constant 0 : index
    %229 = vector.load %arg16[%c1_126, %c0_127, %c0_128] : memref<2x1x48xf32, #tpu.memory_space<vmem>>, vector<1x1x48xf32>
    %230 = vector.shape_cast %229 : vector<1x1x48xf32> to vector<1x48xf32>
    %231 = vector.broadcast %230 : vector<1x48xf32> to vector<16x48xf32>
    %232 = arith.addf %228, %231 : vector<16x48xf32>
    %c0_129 = arith.constant 0 : index
    %c0_130 = arith.constant 0 : index
    %233 = vector.load %arg17[%c0_129, %c0_130] : memref<1x48xf32, #tpu.memory_space<vmem>>, vector<1x48xf32>
    %c0_131 = arith.constant 0 : index
    %c0_132 = arith.constant 0 : index
    %234 = vector.load %arg18[%c0_131, %c0_132] : memref<1x48xf32, #tpu.memory_space<vmem>>, vector<1x48xf32>
    %cst_133 = arith.constant dense<0.000000e+00> : vector<16xf32>
    %235 = vector.multi_reduction <add>, %232, %cst_133 [1] : vector<16x48xf32> to vector<16xf32>
    %236 = vector.shape_cast %235 : vector<16xf32> to vector<16x1xf32>
    %cst_134 = arith.constant 4.800000e+01 : f32
    %237 = vector.broadcast %cst_134 : f32 to vector<16x1xf32>
    %238 = arith.divf %236, %237 : vector<16x1xf32>
    %239 = vector.broadcast %238 : vector<16x1xf32> to vector<16x48xf32>
    %240 = arith.subf %232, %239 : vector<16x48xf32>
    %241 = arith.mulf %240, %240 : vector<16x48xf32>
    %cst_135 = arith.constant dense<0.000000e+00> : vector<16xf32>
    %242 = vector.multi_reduction <add>, %241, %cst_135 [1] : vector<16x48xf32> to vector<16xf32>
    %243 = vector.shape_cast %242 : vector<16xf32> to vector<16x1xf32>
    %cst_136 = arith.constant 4.800000e+01 : f32
    %244 = vector.broadcast %cst_136 : f32 to vector<16x1xf32>
    %245 = arith.divf %243, %244 : vector<16x1xf32>
    %246 = vector.broadcast %238 : vector<16x1xf32> to vector<16x48xf32>
    %247 = arith.subf %232, %246 : vector<16x48xf32>
    %cst_137 = arith.constant 9.99999974E-6 : f32
    %248 = vector.broadcast %cst_137 : f32 to vector<16x1xf32>
    %249 = arith.addf %245, %248 : vector<16x1xf32>
    %250 = math.rsqrt %249 : vector<16x1xf32>
    %251 = vector.broadcast %250 : vector<16x1xf32> to vector<16x48xf32>
    %252 = arith.mulf %247, %251 : vector<16x48xf32>
    %253 = vector.broadcast %233 : vector<1x48xf32> to vector<16x48xf32>
    %254 = arith.mulf %252, %253 : vector<16x48xf32>
    %255 = vector.broadcast %234 : vector<1x48xf32> to vector<16x48xf32>
    %256 = arith.addf %254, %255 : vector<16x48xf32>
    %c0_138 = arith.constant 0 : index
    %c0_139 = arith.constant 0 : index
    %257 = vector.load %arg19[%c0_138, %c0_139] : memref<48x128xf32, #tpu.memory_space<vmem>>, vector<48x128xf32>
    %cst_140 = arith.constant dense<0.000000e+00> : vector<16x128xf32>
    %258 = tpu.matmul %256, %257, %cst_140 {dimension_numbers = #tpu.dot_dimension_numbers<[1], [0], [0], [1], [0, 0, 1, 1], [], []>} : vector<16x48xf32>, vector<48x128xf32>, vector<16x128xf32> -> vector<16x128xf32>
    %c0_141 = arith.constant 0 : index
    %c0_142 = arith.constant 0 : index
    %259 = vector.load %arg20[%c0_141, %c0_142] : memref<1x128xf32, #tpu.memory_space<vmem>>, vector<1x128xf32>
    %260 = vector.broadcast %259 : vector<1x128xf32> to vector<16x128xf32>
    %261 = arith.addf %258, %260 : vector<16x128xf32>
    %c0_143 = arith.constant 0 : index
    %c0_144 = arith.constant 0 : index
    %262 = vector.load %arg21[%c0_143, %c0_144] : memref<16x128xf32, #tpu.memory_space<vmem>>, vector<16x128xf32>
    tpu.vector_store %arg21[%c0_143, %c0_144], %261 {strides = array<i32>} : memref<16x128xf32, #tpu.memory_space<vmem>>, vector<16x128xf32>,
    return
  }
}

</mosaic_0001>

<llo_original>
// kernel: bigram_lm_forward.1
$region0: #{bigram_lm_forward.1}
  #allocation0 [shape = 'u32[]', space=smem, size = 0x4, offset = 0x4, fixed_abs, tag = 'smem constant byte address 0x4 - core index']
  #allocation1 [shape = 'u32[144,128]{1,0:T(1,128)}', space=vmem, size = 0x12000, scoped, tag = 'internal scratch']
  %s0 = inlined_call_operand.vmem [shape: s32[16,1], index: 0, kind: input, shape index: {}]
  %s1 = inlined_call_operand.vmem [shape: f32[128,48], index: 1, kind: input, shape index: {}]
  %s2 = inlined_call_operand.vmem [shape: f32[16,128], index: 2, kind: input, shape index: {}]
  %s3 = inlined_call_operand.vmem [shape: f32[128,48], index: 3, kind: input, shape index: {}]
  %s4 = inlined_call_operand.vmem [shape: f32[2,1,48], index: 4, kind: input, shape index: {}]
  %s5 = inlined_call_operand.vmem [shape: f32[2,1,48], index: 5, kind: input, shape index: {}]
  %s6 = inlined_call_operand.vmem [shape: f32[2,48,48], index: 6, kind: input, shape index: {}]
  %s7 = inlined_call_operand.vmem [shape: f32[2,48,48], index: 7, kind: input, shape index: {}]
  %s8 = inlined_call_operand.vmem [shape: f32[2,48,48], index: 8, kind: input, shape index: {}]
  %s9 = inlined_call_operand.vmem [shape: f32[2,48,48], index: 9, kind: input, shape index: {}]
  %s10 = inlined_call_operand.vmem [shape: f32[2,1,48], index: 10, kind: input, shape index: {}]
  %s11 = inlined_call_operand.vmem [shape: f32[2,1,48], index: 11, kind: input, shape index: {}]
  %s12 = inlined_call_operand.vmem [shape: f32[2,1,48], index: 12, kind: input, shape index: {}]
  %s13 = inlined_call_operand.vmem [shape: f32[2,48,192], index: 13, kind: input, shape index: {}]
  %s14 = inlined_call_operand.vmem [shape: f32[2,1,192], index: 14, kind: input, shape index: {}]
  %s15 = inlined_call_operand.vmem [shape: f32[2,192,48], index: 15, kind: input, shape index: {}]
  %s16 = inlined_call_operand.vmem [shape: f32[2,1,48], index: 16, kind: input, shape index: {}]
  %s17 = inlined_call_operand.vmem [shape: f32[1,48], index: 17, kind: input, shape index: {}]
  %s18 = inlined_call_operand.vmem [shape: f32[1,48], index: 18, kind: input, shape index: {}]
  %s19 = inlined_call_operand.vmem [shape: f32[48,128], index: 19, kind: input, shape index: {}]
  %s20 = inlined_call_operand.vmem [shape: f32[1,128], index: 20, kind: input, shape index: {}]
  %s21 = inlined_call_operand.vmem [shape: f32[16,128], index: 21, kind: output, shape index: {}]
  %s22 = sld [smem:[#allocation0]]
  $region94: #{bigram_lm_forward.1} parent=0
    _
  %s24 = ssub.s32 1, %s22
  %s25 = scalar_select 0, %s24, %s22
  // Predicated region
  $region2: #{bigram_lm_forward.1} parent=0 // pred_check
    _
  $region3: #{bigram_lm_forward.1} parent=0 // pred_check_branch
    %27 = sbr.rel (0) target = $region5
  $region4: #{bigram_lm_forward.1} parent=0 // pred_region
    _
  $region5: #{bigram_lm_forward.1} parent=0 // pred_fallthru
    _
  // Predicated region
  $region6: #{bigram_lm_forward.1} parent=0 // pred_check
    _
  $region7: #{bigram_lm_forward.1} parent=0 // pred_check_branch
    %29 = sbr.rel (0) target = $region9
  $region8: #{bigram_lm_forward.1} parent=0 // pred_region
    _
  $region9: #{bigram_lm_forward.1} parent=0 // pred_fallthru
    _
  // Predicated region
  $region10: #{bigram_lm_forward.1} parent=0 // pred_check
    _
  $region11: #{bigram_lm_forward.1} parent=0 // pred_check_branch
    %31 = sbr.rel (0) target = $region13
  $region12: #{bigram_lm_forward.1} parent=0 // pred_region
    _
  $region13: #{bigram_lm_forward.1} parent=0 // pred_fallthru
    _
  // Predicated region
  $region14: #{bigram_lm_forward.1} parent=0 // pred_check
    _
  $region15: #{bigram_lm_forward.1} parent=0 // pred_check_branch
    %33 = sbr.rel (0) target = $region17
  $region16: #{bigram_lm_forward.1} parent=0 // pred_region
    _
  $region17: #{bigram_lm_forward.1} parent=0 // pred_fallthru
    _
  // Predicated region
  $region18: #{bigram_lm_forward.1} parent=0 // pred_check
    _
  $region19: #{bigram_lm_forward.1} parent=0 // pred_check_branch
    %35 = sbr.rel (0) target = $region21
  $region20: #{bigram_lm_forward.1} parent=0 // pred_region
    _
  $region21: #{bigram_lm_forward.1} parent=0 // pred_fallthru
    _
  // Predicated region
  $region22: #{bigram_lm_forward.1} parent=0 // pred_check
    _
  $region23: #{bigram_lm_forward.1} parent=0 // pred_check_branch
    %37 = sbr.rel (0) target = $region25
  $region24: #{bigram_lm_forward.1} parent=0 // pred_region
    _
  $region25: #{bigram_lm_forward.1} parent=0 // pred_fallthru
    _
  // Predicated region
  $region26: #{bigram_lm_forward.1} parent=0 // pred_check
    _
  $region27: #{bigram_lm_forward.1} parent=0 // pred_check_branch
    %39 = sbr.rel (0) target = $region29
  $region28: #{bigram_lm_forward.1} parent=0 // pred_region
    _
  $region29: #{bigram_lm_forward.1} parent=0 // pred_fallthru
    _
  // Predicated region
  $region30: #{bigram_lm_forward.1} parent=0 // pred_check
    _
  $region31: #{bigram_lm_forward.1} parent=0 // pred_check_branch
    %41 = sbr.rel (0) target = $region33
  $region32: #{bigram_lm_forward.1} parent=0 // pred_region
    _
  $region33: #{bigram_lm_forward.1} parent=0 // pred_fallthru
    _
  // Predicated region
  $region34: #{bigram_lm_forward.1} parent=0 // pred_check
    _
  $region35: #{bigram_lm_forward.1} parent=0 // pred_check_branch
    %43 = sbr.rel (0) target = $region37
  $region36: #{bigram_lm_forward.1} parent=0 // pred_region
    _
  $region37: #{bigram_lm_forward.1} parent=0 // pred_fallthru
    _
  // Predicated region
  $region38: #{bigram_lm_forward.1} parent=0 // pred_check
    _
  $region39: #{bigram_lm_forward.1} parent=0 // pred_check_branch
    %45 = sbr.rel (0) target = $region41
  $region40: #{bigram_lm_forward.1} parent=0 // pred_region
    _
  $region41: #{bigram_lm_forward.1} parent=0 // pred_fallthru
    _
  // Predicated region
  $region42: #{bigram_lm_forward.1} parent=0 // pred_check
    _
  $region43: #{bigram_lm_forward.1} parent=0 // pred_check_branch
    %47 = sbr.rel (0) target = $region45
  $region44: #{bigram_lm_forward.1} parent=0 // pred_region
    _
  $region45: #{bigram_lm_forward.1} parent=0 // pred_fallthru
    _
  // Predicated region
  $region46: #{bigram_lm_forward.1} parent=0 // pred_check
    _
  $region47: #{bigram_lm_forward.1} parent=0 // pred_check_branch
    %49 = sbr.rel (0) target = $region49
  $region48: #{bigram_lm_forward.1} parent=0 // pred_region
    _
  $region49: #{bigram_lm_forward.1} parent=0 // pred_fallthru
    _
  // Predicated region
  $region50: #{bigram_lm_forward.1} parent=0 // pred_check
    _
  $region51: #{bigram_lm_forward.1} parent=0 // pred_check_branch
    %51 = sbr.rel (0) target = $region53
  $region52: #{bigram_lm_forward.1} parent=0 // pred_region
    _
  $region53: #{bigram_lm_forward.1} parent=0 // pred_fallthru
    _
  // Predicated region
  $region54: #{bigram_lm_forward.1} parent=0 // pred_check
    _
  $region55: #{bigram_lm_forward.1} parent=0 // pred_check_branch
    %53 = sbr.rel (0) target = $region57
  $region56: #{bigram_lm_forward.1} parent=0 // pred_region
    _
  $region57: #{bigram_lm_forward.1} parent=0 // pred_fallthru
    _
  // Predicated region
  $region58: #{bigram_lm_forward.1} parent=0 // pred_check
    _
  $region59: #{bigram_lm_forward.1} parent=0 // pred_check_branch
    %55 = sbr.rel (0) target = $region61
  $region60: #{bigram_lm_forward.1} parent=0 // pred_region
    _
  $region61: #{bigram_lm_forward.1} parent=0 // pred_fallthru
    _
  // Predicated region
  $region62: #{bigram_lm_forward.1} parent=0 // pred_check
    _
  $region63: #{bigram_lm_forward.1} parent=0 // pred_check_branch
    %57 = sbr.rel (0) target = $region65
  $region64: #{bigram_lm_forward.1} parent=0 // pred_region
    _
  $region65: #{bigram_lm_forward.1} parent=0 // pred_fallthru
    _
  // Predicated region
  $region66: #{bigram_lm_forward.1} parent=0 // pred_check
    _
  $region67: #{bigram_lm_forward.1} parent=0 // pred_check_branch
    %59 = sbr.rel (0) target = $region69
  $region68: #{bigram_lm_forward.1} parent=0 // pred_region
    _
  $region69: #{bigram_lm_forward.1} parent=0 // pred_fallthru
    _
  // Predicated region
  $region70: #{bigram_lm_forward.1} parent=0 // pred_check
    _
  $region71: #{bigram_lm_forward.1} parent=0 // pred_check_branch
    %61 = sbr.rel (0) target = $region73
  $region72: #{bigram_lm_forward.1} parent=0 // pred_region
    _
  $region73: #{bigram_lm_forward.1} parent=0 // pred_fallthru
    _
  // Predicated region
  $region74: #{bigram_lm_forward.1} parent=0 // pred_check
    _
  $region75: #{bigram_lm_forward.1} parent=0 // pred_check_branch
    %63 = sbr.rel (0) target = $region77
  $region76: #{bigram_lm_forward.1} parent=0 // pred_region
    _
  $region77: #{bigram_lm_forward.1} parent=0 // pred_fallthru
    _
  // Predicated region
  $region78: #{bigram_lm_forward.1} parent=0 // pred_check
    _
  $region79: #{bigram_lm_forward.1} parent=0 // pred_check_branch
    %65 = sbr.rel (0) target = $region81
  $region80: #{bigram_lm_forward.1} parent=0 // pred_region
    _
  $region81: #{bigram_lm_forward.1} parent=0 // pred_fallthru
    _
  // Predicated region
  $region82: #{bigram_lm_forward.1} parent=0 // pred_check
    _
  $region83: #{bigram_lm_forward.1} parent=0 // pred_check_branch
    %67 = sbr.rel (0) target = $region85
  $region84: #{bigram_lm_forward.1} parent=0 // pred_region
    _
  $region85: #{bigram_lm_forward.1} parent=0 // pred_fallthru
    _
  %v68 = vld [vmem:[%s0] sm:$0xff]
  %v69 = vld [vmem:[%s0 + $0x8] sm:$0xff]
  %v70 = vld [vmem:[%s1] sm:$0xff]
  %v71 = vld [vmem:[%s1 + $0x8] sm:$0xff]
  %v72 = vld [vmem:[%s1 + $0x10] sm:$0xff]
  %v73 = vld [vmem:[%s1 + $0x18] sm:$0xff]
  %v74 = vld [vmem:[%s1 + $0x20] sm:$0xff]
  %v75 = vld [vmem:[%s1 + $0x28] sm:$0xff]
  %v76 = vld [vmem:[%s1 + $0x30] sm:$0xff]
  %v77 = vld [vmem:[%s1 + $0x38] sm:$0xff]
  %v78 = vld [vmem:[%s1 + $0x40] sm:$0xff]
  %v79 = vld [vmem:[%s1 + $0x48] sm:$0xff]
  %v80 = vld [vmem:[%s1 + $0x50] sm:$0xff]
  %v81 = vld [vmem:[%s1 + $0x58] sm:$0xff]
  %v82 = vld [vmem:[%s1 + $0x60] sm:$0xff]
  %v83 = vld [vmem:[%s1 + $0x68] sm:$0xff]
  %v84 = vld [vmem:[%s1 + $0x70] sm:$0xff]
  %v85 = vld [vmem:[%s1 + $0x78] sm:$0xff]
  %v86 = vlaneseq
  %v87 = vand.u32 %v86, 127
  %v88 = vlaneseq
  %v89 = vshrl.u32 %v88, 7
  %v90 = vadd.s32 %v89, 8
  %91 = vset.pattern.permute.xlu0 0
  %92 = vperm.xlu0 %91, %v68
  %v93 = vpop.permute.xlu0 %92
  %94 = vset.pattern.permute.xlu0 0
  %95 = vperm.xlu0 %94, %v69
  %v96 = vpop.permute.xlu0 %95
  %vm97 = vcmp.eq.s32.totalorder %v87, %v93
  %vm98 = vcmp.eq.s32.totalorder %v87, %v96
  %vm99 = vcmp.lt.s32.totalorder %v89, 0
  %v100 = vsub.s32 0, %v89
  %v101 = vsel %vm99, %v100, %v89
  %v102 = vshrl.u32 %v101, 3
  %v103 = vand.u32 %v101, 7
  %v104 = vsub.s32 0, %v103
  %v105 = vsel %vm99, %v104, %v103
  %vm106 = vcmp.lt.s32.totalorder %v90, 0
  %v107 = vsub.s32 0, %v90
  %v108 = vsel %vm106, %v107, %v90
  %v109 = vshrl.u32 %v108, 3
  %v110 = vand.u32 %v108, 7
  %v111 = vsub.s32 0, %v110
  %v112 = vsel %vm106, %v111, %v110
  %vm113 = vcmp.ne.s32.totalorder %v105, 0
  %vm114 = vcmp.ne.s32.totalorder %v112, 0
  %vm115 = vcmp.lt.s32.totalorder %v105, 0
  %vm116 = vcmp.lt.s32.totalorder %v112, 0
  %vm117 = vmand %vm115, %vm113
  %vm118 = vmand %vm116, %vm114
  %v119 = vadd.s32 %v105, 8
  %v120 = vadd.s32 %v112, 8
  %v121 = vsel %vm117, %v119, %v105
  %v122 = vsel %vm118, %v120, %v112
  %v123 = vadd.s32 %v121, 65
  %v124 = vadd.s32 %v122, 65
  %vm125 = vcmp.eq.s32.totalorder %v87, %v123
  %vm126 = vcmp.eq.s32.totalorder %v87, %v124
  %vm127 = vmor %vm97, %vm125
  %vm128 = vmor %vm98, %vm126
  %v129 = vsel %vm127, 1, 0
  %v130 = vsel %vm128, 1, 0
  %v131 = vcvt.s32.f32 %v129
  %v132 = vcvt.s32.f32 %v130
  %133 = vmatprep.subr.mxu0 0.0
  %134 = vmatpush1.msra.mxu0 %v70
  %135 = vmatprep.subr.mxu0 0.0
  %136 = vmatpush1.msra.mxu0 %v71
  %137 = vmatprep.subr.mxu0 0.0
  %138 = vmatpush1.msra.mxu0 %v72
  %139 = vmatprep.subr.mxu0 0.0
  %140 = vmatpush1.msra.mxu0 %v73
  %141 = vmatprep.subr.mxu0 0.0
  %142 = vmatpush1.msra.mxu0 %v74
  %143 = vmatprep.subr.mxu0 0.0
  %144 = vmatpush1.msra.mxu0 %v75
  %145 = vmatprep.subr.mxu0 0.0
  %146 = vmatpush1.msra.mxu0 %v76
  %147 = vmatprep.subr.mxu0 0.0
  %148 = vmatpush1.msra.mxu0 %v77
  %149 = vmatprep.subr.mxu0 0.0
  %150 = vmatpush1.msra.mxu0 %v78
  %151 = vmatprep.subr.mxu0 0.0
  %152 = vmatpush1.msra.mxu0 %v79
  %153 = vmatprep.subr.mxu0 0.0
  %154 = vmatpush1.msra.mxu0 %v80
  %155 = vmatprep.subr.mxu0 0.0
  %156 = vmatpush1.msra.mxu0 %v81
  %157 = vmatprep.subr.mxu0 0.0
  %158 = vmatpush1.msra.mxu0 %v82
  %159 = vmatprep.subr.mxu0 0.0
  %160 = vmatpush1.msra.mxu0 %v83
  %161 = vmatprep.subr.mxu0 0.0
  %162 = vmatpush1.msra.mxu0 %v84
  %163 = vmatprep.subr.mxu0 0.0
  %164 = vmatpush1.msra.mxu0 %v85
  %165 = vmatprep.subr.mxu0 0.0
  %166 = vmatpush1.msra.mxu0 0.0
  %167 = vmatprep.subr.mxu0 0.0
  %168 = vmatpush1.msra.mxu0 0.0
  %169 = vmatprep.subr.mxu0 0.0
  %170 = vmatpush1.msra.mxu0 0.0
  %171 = vmatprep.subr.mxu0 0.0
  %172 = vmatpush1.msra.mxu0 0.0
  %173 = vmatprep.subr.mxu0 0.0
  %174 = vmatpush1.msra.mxu0 0.0
  %175 = vmatprep.subr.mxu0 0.0
  %176 = vmatpush1.msra.mxu0 0.0
  %177 = vmatprep.subr.mxu0 0.0
  %178 = vmatpush1.msra.mxu0 0.0
  %179 = vmatprep.subr.mxu0 0.0
  %180 = vmatpush1.msra.mxu0 0.0
  %181 = vmatprep.subr.mxu0 0.0
  %182 = vmatpush1.msra.mxu0 0.0
  %183 = vmatprep.subr.mxu0 0.0
  %184 = vmatpush1.msra.mxu0 0.0
  %185 = vmatprep.subr.mxu0 0.0
  %186 = vmatpush1.msra.mxu0 0.0
  %187 = vmatprep.subr.mxu0 0.0
  %188 = vmatpush1.msra.mxu0 0.0
  %189 = vmatprep.subr.mxu0 0.0
  %190 = vmatpush1.msra.mxu0 0.0
  %191 = vmatprep.subr.mxu0 0.0
  %192 = vmatpush1.msra.mxu0 0.0
  %193 = vmatprep.subr.mxu0 0.0
  %194 = vmatpush1.msra.mxu0 0.0
  %195 = vmatprep.subr.mxu0 0.0
  %196 = vmatpush1.msra.mxu0 0.0
  %197 = vmatprep.mubr.f32.mxu0 0.0
  %198 = vmatmul.mubr.f32.gmra.mrb[0].mxu0 %v131
  %v199 = vpop.f32.mrb[0].mxu0
  %v200 = vadd.f32 0.0, %v199
  %v201 = vpop.f32.mrb[0].mxu0
  %202 = vmatprep.mubr.f32.mxu0 0.0
  %203 = vmatmul.mubr.f32.gmra.mrb[0].mxu0 %v132
  %v204 = vpop.f32.mrb[0].mxu0
  %v205 = vadd.f32 0.0, %v204
  %v206 = vpop.f32.mrb[0].mxu0
  %207 = vdwg.mxu0
  %v208 = vld [vmem:[%s2] sm:$0xff]
  %v209 = vld [vmem:[%s2 + $0x8] sm:$0xff]
  %v210 = vld [vmem:[%s3] sm:$0xff]
  %v211 = vld [vmem:[%s3 + $0x8] sm:$0xff]
  %v212 = vld [vmem:[%s3 + $0x10] sm:$0xff]
  %v213 = vld [vmem:[%s3 + $0x18] sm:$0xff]
  %v214 = vld [vmem:[%s3 + $0x20] sm:$0xff]
  %v215 = vld [vmem:[%s3 + $0x28] sm:$0xff]
  %v216 = vld [vmem:[%s3 + $0x30] sm:$0xff]
  %v217 = vld [vmem:[%s3 + $0x38] sm:$0xff]
  %v218 = vld [vmem:[%s3 + $0x40] sm:$0xff]
  %v219 = vld [vmem:[%s3 + $0x48] sm:$0xff]
  %v220 = vld [vmem:[%s3 + $0x50] sm:$0xff]
  %v221 = vld [vmem:[%s3 + $0x58] sm:$0xff]
  %v222 = vld [vmem:[%s3 + $0x60] sm:$0xff]
  %v223 = vld [vmem:[%s3 + $0x68] sm:$0xff]
  %v224 = vld [vmem:[%s3 + $0x70] sm:$0xff]
  %v225 = vld [vmem:[%s3 + $0x78] sm:$0xff]
  %v226 = vld [vmem:[%s4] sm:$0x1]
  %v227 = vld [vmem:[%s5] sm:$0x1]
  %vm228 = vcmask 392192
  %v229 = vsel %vm228, %v200, 0.0
  %230 = vadd.xlane.f32.xlu0 %v229
  %v231 = vpop.xlane.xlu0 %230
  %v232 = vsel %vm228, %v205, 0.0
  %233 = vadd.xlane.f32.xlu0 %v232
  %v234 = vpop.xlane.xlu0 %233
  %v235 = vrcp.pop 48.0
  %v236 = vmul.f32 %v231, %v235
  %v237 = vmul.f32 %v234, %v235
  %v238 = vsub.f32 %v200, %v236
  %v239 = vsub.f32 %v205, %v237
  %v240 = vmul.f32 %v238, %v238
  %v241 = vmul.f32 %v239, %v239
  %v242 = vsel %vm228, %v240, 0.0
  %243 = vadd.xlane.f32.xlu0 %v242
  %v244 = vpop.xlane.xlu0 %243
  %v245 = vsel %vm228, %v241, 0.0
  %246 = vadd.xlane.f32.xlu0 %v245
  %v247 = vpop.xlane.xlu0 %246
  %v248 = vmul.f32 %v244, %v235
  %v249 = vmul.f32 %v247, %v235
  %v250 = vadd.f32 %v248, 1e-05
  %v251 = vadd.f32 %v249, 1e-05
  %v252 = vrsqrt.pop %v250
  %v253 = vrsqrt.pop %v251
  %v254 = vmul.f32 %v238, %v252
  %v255 = vmul.f32 %v239, %v253
  %v257 = vlaneseq
  %v258 = vshrl.u32 %v257, 7
  %v259 = vsub.s32 0, %v258
  %v260 = vrot.slane %v226, %v259
  %v262 = vmul.f32 %v254, %v260
  %v263 = vmul.f32 %v255, %v260
  %v265 = vlaneseq
  %v266 = vshrl.u32 %v265, 7
  %v267 = vsub.s32 0, %v266
  %v268 = vrot.slane %v227, %v267
  %v270 = vadd.f32 %v262, %v268
  %v271 = vadd.f32 %v263, %v268
  %v272 = vld [vmem:[%s6] sm:$0xff]
  %v273 = vld [vmem:[%s6 + $0x8] sm:$0xff]
  %v274 = vld [vmem:[%s6 + $0x10] sm:$0xff]
  %v275 = vld [vmem:[%s6 + $0x18] sm:$0xff]
  %v276 = vld [vmem:[%s6 + $0x20] sm:$0xff]
  %v277 = vld [vmem:[%s6 + $0x28] sm:$0xff]
  %v279 = vsel %vm228, %v270, 0
  %v282 = vsel %vm228, %v271, 0
  %284 = vmatprep.subr.mxu0 0.0
  %285 = vmatpush1.msra.mxu0 %v272
  %286 = vmatprep.subr.mxu0 0.0
  %287 = vmatpush1.msra.mxu0 %v273
  %288 = vmatprep.subr.mxu0 0.0
  %289 = vmatpush1.msra.mxu0 %v274
  %290 = vmatprep.subr.mxu0 0.0
  %291 = vmatpush1.msra.mxu0 %v275
  %292 = vmatprep.subr.mxu0 0.0
  %293 = vmatpush1.msra.mxu0 %v276
  %294 = vmatprep.subr.mxu0 0.0
  %295 = vmatpush1.msra.mxu0 %v277
  %296 = vmatprep.subr.mxu0 0.0
  %297 = vmatpush1.msra.mxu0 0.0
  %298 = vmatprep.subr.mxu0 0.0
  %299 = vmatpush1.msra.mxu0 0.0
  %300 = vmatprep.subr.mxu0 0.0
  %301 = vmatpush1.msra.mxu0 0.0
  %302 = vmatprep.subr.mxu0 0.0
  %303 = vmatpush1.msra.mxu0 0.0
  %304 = vmatprep.subr.mxu0 0.0
  %305 = vmatpush1.msra.mxu0 0.0
  %306 = vmatprep.subr.mxu0 0.0
  %307 = vmatpush1.msra.mxu0 0.0
  %308 = vmatprep.subr.mxu0 0.0
  %309 = vmatpush1.msra.mxu0 0.0
  %310 = vmatprep.subr.mxu0 0.0
  %311 = vmatpush1.msra.mxu0 0.0
  %312 = vmatprep.subr.mxu0 0.0
  %313 = vmatpush1.msra.mxu0 0.0
  %314 = vmatprep.subr.mxu0 0.0
  %315 = vmatpush1.msra.mxu0 0.0
  %316 = vmatprep.subr.mxu0 0.0
  %317 = vmatpush1.msra.mxu0 0.0
  %318 = vmatprep.subr.mxu0 0.0
  %319 = vmatpush1.msra.mxu0 0.0
  %320 = vmatprep.subr.mxu0 0.0
  %321 = vmatpush1.msra.mxu0 0.0
  %322 = vmatprep.subr.mxu0 0.0
  %323 = vmatpush1.msra.mxu0 0.0
  %324 = vmatprep.subr.mxu0 0.0
  %325 = vmatpush1.msra.mxu0 0.0
  %326 = vmatprep.subr.mxu0 0.0
  %327 = vmatpush1.msra.mxu0 0.0
  %328 = vmatprep.subr.mxu0 0.0
  %329 = vmatpush1.msra.mxu0 0.0
  %330 = vmatprep.subr.mxu0 0.0
  %331 = vmatpush1.msra.mxu0 0.0
  %332 = vmatprep.subr.mxu0 0.0
  %333 = vmatpush1.msra.mxu0 0.0
  %334 = vmatprep.subr.mxu0 0.0
  %335 = vmatpush1.msra.mxu0 0.0
  %336 = vmatprep.subr.mxu0 0.0
  %337 = vmatpush1.msra.mxu0 0.0
  %338 = vmatprep.subr.mxu0 0.0
  %339 = vmatpush1.msra.mxu0 0.0
  %340 = vmatprep.subr.mxu0 0.0
  %341 = vmatpush1.msra.mxu0 0.0
  %342 = vmatprep.subr.mxu0 0.0
  %343 = vmatpush1.msra.mxu0 0.0
  %344 = vmatprep.subr.mxu0 0.0
  %345 = vmatpush1.msra.mxu0 0.0
  %346 = vmatprep.subr.mxu0 0.0
  %347 = vmatpush1.msra.mxu0 0.0
  %348 = vmatprep.mubr.f32.mxu0 0.0
  %349 = vmatmul.mubr.f32.gmra.mrb[0].mxu0 %v279
  %v350 = vpop.f32.mrb[0].mxu0
  %v351 = vadd.f32 0.0, %v350
  %v352 = vpop.f32.mrb[0].mxu0
  %353 = vmatprep.mubr.f32.mxu0 0.0
  %354 = vmatmul.mubr.f32.gmra.mrb[0].mxu0 %v282
  %v355 = vpop.f32.mrb[0].mxu0
  %v356 = vadd.f32 0.0, %v355
  %v357 = vpop.f32.mrb[0].mxu0
  %358 = vdwg.mxu0
  %v359 = vld [vmem:[%s7] sm:$0xff]
  %v360 = vld [vmem:[%s7 + $0x8] sm:$0xff]
  %v361 = vld [vmem:[%s7 + $0x10] sm:$0xff]
  %v362 = vld [vmem:[%s7 + $0x18] sm:$0xff]
  %v363 = vld [vmem:[%s7 + $0x20] sm:$0xff]
  %v364 = vld [vmem:[%s7 + $0x28] sm:$0xff]
  %365 = vmatprep.subr.mxu0 0.0
  %366 = vmatpush1.msra.mxu0 %v359
  %367 = vmatprep.subr.mxu0 0.0
  %368 = vmatpush1.msra.mxu0 %v360
  %369 = vmatprep.subr.mxu0 0.0
  %370 = vmatpush1.msra.mxu0 %v361
  %371 = vmatprep.subr.mxu0 0.0
  %372 = vmatpush1.msra.mxu0 %v362
  %373 = vmatprep.subr.mxu0 0.0
  %374 = vmatpush1.msra.mxu0 %v363
  %375 = vmatprep.subr.mxu0 0.0
  %376 = vmatpush1.msra.mxu0 %v364
  %377 = vmatprep.subr.mxu0 0.0
  %378 = vmatpush1.msra.mxu0 0.0
  %379 = vmatprep.subr.mxu0 0.0
  %380 = vmatpush1.msra.mxu0 0.0
  %381 = vmatprep.subr.mxu0 0.0
  %382 = vmatpush1.msra.mxu0 0.0
  %383 = vmatprep.subr.mxu0 0.0
  %384 = vmatpush1.msra.mxu0 0.0
  %385 = vmatprep.subr.mxu0 0.0
  %386 = vmatpush1.msra.mxu0 0.0
  %387 = vmatprep.subr.mxu0 0.0
  %388 = vmatpush1.msra.mxu0 0.0
  %389 = vmatprep.subr.mxu0 0.0
  %390 = vmatpush1.msra.mxu0 0.0
  %391 = vmatprep.subr.mxu0 0.0
  %392 = vmatpush1.msra.mxu0 0.0
  %393 = vmatprep.subr.mxu0 0.0
  %394 = vmatpush1.msra.mxu0 0.0
  %395 = vmatprep.subr.mxu0 0.0
  %396 = vmatpush1.msra.mxu0 0.0
  %397 = vmatprep.subr.mxu0 0.0
  %398 = vmatpush1.msra.mxu0 0.0
  %399 = vmatprep.subr.mxu0 0.0
  %400 = vmatpush1.msra.mxu0 0.0
  %401 = vmatprep.subr.mxu0 0.0
  %402 = vmatpush1.msra.mxu0 0.0
  %403 = vmatprep.subr.mxu0 0.0
  %404 = vmatpush1.msra.mxu0 0.0
  %405 = vmatprep.subr.mxu0 0.0
  %406 = vmatpush1.msra.mxu0 0.0
  %407 = vmatprep.subr.mxu0 0.0
  %408 = vmatpush1.msra.mxu0 0.0
  %409 = vmatprep.subr.mxu0 0.0
  %410 = vmatpush1.msra.mxu0 0.0
  %411 = vmatprep.subr.mxu0 0.0
  %412 = vmatpush1.msra.mxu0 0.0
  %413 = vmatprep.subr.mxu0 0.0
  %414 = vmatpush1.msra.mxu0 0.0
  %415 = vmatprep.subr.mxu0 0.0
  %416 = vmatpush1.msra.mxu0 0.0
  %417 = vmatprep.subr.mxu0 0.0
  %418 = vmatpush1.msra.mxu0 0.0
  %419 = vmatprep.subr.mxu0 0.0
  %420 = vmatpush1.msra.mxu0 0.0
  %421 = vmatprep.subr.mxu0 0.0
  %422 = vmatpush1.msra.mxu0 0.0
  %423 = vmatprep.subr.mxu0 0.0
  %424 = vmatpush1.msra.mxu0 0.0
  %425 = vmatprep.subr.mxu0 0.0
  %426 = vmatpush1.msra.mxu0 0.0
  %427 = vmatprep.subr.mxu0 0.0
  %428 = vmatpush1.msra.mxu0 0.0
  %429 = vmatprep.mubr.f32.mxu0 0.0
  %430 = vmatmul.mubr.f32.gmra.mrb[0].mxu0 %v279
  %v431 = vpop.f32.mrb[0].mxu0
  %v432 = vadd.f32 0.0, %v431
  %v433 = vpop.f32.mrb[0].mxu0
  %434 = vmatprep.mubr.f32.mxu0 0.0
  %435 = vmatmul.mubr.f32.gmra.mrb[0].mxu0 %v282
  %v436 = vpop.f32.mrb[0].mxu0
  %v437 = vadd.f32 0.0, %v436
  %v438 = vpop.f32.mrb[0].mxu0
  %439 = vdwg.mxu0
  %v440 = vld [vmem:[%s8] sm:$0xff]
  %v441 = vld [vmem:[%s8 + $0x8] sm:$0xff]
  %v442 = vld [vmem:[%s8 + $0x10] sm:$0xff]
  %v443 = vld [vmem:[%s8 + $0x18] sm:$0xff]
  %v444 = vld [vmem:[%s8 + $0x20] sm:$0xff]
  %v445 = vld [vmem:[%s8 + $0x28] sm:$0xff]
  %446 = vmatprep.subr.mxu0 0.0
  %447 = vmatpush1.msra.mxu0 %v440
  %448 = vmatprep.subr.mxu0 0.0
  %449 = vmatpush1.msra.mxu0 %v441
  %450 = vmatprep.subr.mxu0 0.0
  %451 = vmatpush1.msra.mxu0 %v442
  %452 = vmatprep.subr.mxu0 0.0
  %453 = vmatpush1.msra.mxu0 %v443
  %454 = vmatprep.subr.mxu0 0.0
  %455 = vmatpush1.msra.mxu0 %v444
  %456 = vmatprep.subr.mxu0 0.0
  %457 = vmatpush1.msra.mxu0 %v445
  %458 = vmatprep.subr.mxu0 0.0
  %459 = vmatpush1.msra.mxu0 0.0
  %460 = vmatprep.subr.mxu0 0.0
  %461 = vmatpush1.msra.mxu0 0.0
  %462 = vmatprep.subr.mxu0 0.0
  %463 = vmatpush1.msra.mxu0 0.0
  %464 = vmatprep.subr.mxu0 0.0
  %465 = vmatpush1.msra.mxu0 0.0
  %466 = vmatprep.subr.mxu0 0.0
  %467 = vmatpush1.msra.mxu0 0.0
  %468 = vmatprep.subr.mxu0 0.0
  %469 = vmatpush1.msra.mxu0 0.0
  %470 = vmatprep.subr.mxu0 0.0
  %471 = vmatpush1.msra.mxu0 0.0
  %472 = vmatprep.subr.mxu0 0.0
  %473 = vmatpush1.msra.mxu0 0.0
  %474 = vmatprep.subr.mxu0 0.0
  %475 = vmatpush1.msra.mxu0 0.0
  %476 = vmatprep.subr.mxu0 0.0
  %477 = vmatpush1.msra.mxu0 0.0
  %478 = vmatprep.subr.mxu0 0.0
  %479 = vmatpush1.msra.mxu0 0.0
  %480 = vmatprep.subr.mxu0 0.0
  %481 = vmatpush1.msra.mxu0 0.0
  %482 = vmatprep.subr.mxu0 0.0
  %483 = vmatpush1.msra.mxu0 0.0
  %484 = vmatprep.subr.mxu0 0.0
  %485 = vmatpush1.msra.mxu0 0.0
  %486 = vmatprep.subr.mxu0 0.0
  %487 = vmatpush1.msra.mxu0 0.0
  %488 = vmatprep.subr.mxu0 0.0
  %489 = vmatpush1.msra.mxu0 0.0
  %490 = vmatprep.subr.mxu0 0.0
  %491 = vmatpush1.msra.mxu0 0.0
  %492 = vmatprep.subr.mxu0 0.0
  %493 = vmatpush1.msra.mxu0 0.0
  %494 = vmatprep.subr.mxu0 0.0
  %495 = vmatpush1.msra.mxu0 0.0
  %496 = vmatprep.subr.mxu0 0.0
  %497 = vmatpush1.msra.mxu0 0.0
  %498 = vmatprep.subr.mxu0 0.0
  %499 = vmatpush1.msra.mxu0 0.0
  %500 = vmatprep.subr.mxu0 0.0
  %501 = vmatpush1.msra.mxu0 0.0
  %502 = vmatprep.subr.mxu0 0.0
  %503 = vmatpush1.msra.mxu0 0.0
  %504 = vmatprep.subr.mxu0 0.0
  %505 = vmatpush1.msra.mxu0 0.0
  %506 = vmatprep.subr.mxu0 0.0
  %507 = vmatpush1.msra.mxu0 0.0
  %508 = vmatprep.subr.mxu0 0.0
  %509 = vmatpush1.msra.mxu0 0.0
  %510 = vmatprep.mubr.f32.mxu0 0.0
  %511 = vmatmul.mubr.f32.gmra.mrb[0].mxu0 %v279
  %v512 = vpop.f32.mrb[0].mxu0
  %v513 = vadd.f32 0.0, %v512
  %v514 = vpop.f32.mrb[0].mxu0
  %515 = vmatprep.mubr.f32.mxu0 0.0
  %516 = vmatmul.mubr.f32.gmra.mrb[0].mxu0 %v282
  %v517 = vpop.f32.mrb[0].mxu0
  %v518 = vadd.f32 0.0, %v517
  %v519 = vpop.f32.mrb[0].mxu0
  %520 = vdwg.mxu0
  %v521 = vmul.f32 %v432, %v210
  %v522 = vmul.f32 %v437, %v211
  %v523 = vmul.f32 %v432, %v212
  %v524 = vmul.f32 %v437, %v213
  %v525 = vmul.f32 %v432, %v214
  %v526 = vmul.f32 %v437, %v215
  %v527 = vmul.f32 %v432, %v216
  %v528 = vmul.f32 %v437, %v217
  %v529 = vmul.f32 %v432, %v218
  %v530 = vmul.f32 %v437, %v219
  %v531 = vmul.f32 %v432, %v220
  %v532 = vmul.f32 %v437, %v221
  %v533 = vmul.f32 %v432, %v222
  %v534 = vmul.f32 %v437, %v223
  %v535 = vmul.f32 %v432, %v224
  %v536 = vmul.f32 %v437, %v225
  %v537 = vmul.f32 %v513, %v210
  %v538 = vmul.f32 %v518, %v211
  %v539 = vmul.f32 %v513, %v212
  %v540 = vmul.f32 %v518, %v213
  %v541 = vmul.f32 %v513, %v214
  %v542 = vmul.f32 %v518, %v215
  %v543 = vmul.f32 %v513, %v216
  %v544 = vmul.f32 %v518, %v217
  %v545 = vmul.f32 %v513, %v218
  %v546 = vmul.f32 %v518, %v219
  %v547 = vmul.f32 %v513, %v220
  %v548 = vmul.f32 %v518, %v221
  %v549 = vmul.f32 %v513, %v222
  %v550 = vmul.f32 %v518, %v223
  %v551 = vmul.f32 %v513, %v224
  %v552 = vmul.f32 %v518, %v225
  %v554 = vsel %vm228, %v351, 0
  %v557 = vsel %vm228, %v356, 0
  %v560 = vsel %vm228, %v521, 0
  %v563 = vsel %vm228, %v522, 0
  %v566 = vsel %vm228, %v523, 0
  %v569 = vsel %vm228, %v524, 0
  %v572 = vsel %vm228, %v525, 0
  %v575 = vsel %vm228, %v526, 0
  %v578 = vsel %vm228, %v527, 0
  %v581 = vsel %vm228, %v528, 0
  %v584 = vsel %vm228, %v529, 0
  %v587 = vsel %vm228, %v530, 0
  %v590 = vsel %vm228, %v531, 0
  %v593 = vsel %vm228, %v532, 0
  %v596 = vsel %vm228, %v533, 0
  %v599 = vsel %vm228, %v534, 0
  %v602 = vsel %vm228, %v535, 0
  %v605 = vsel %vm228, %v536, 0
  %607 = vmatprep.subr.mxu0 0.0
  %608 = vmatpush1.xpose.msra.mxu0 %v560
  %609 = vmatprep.subr.mxu0 0.0
  %610 = vmatpush1.xpose.msra.mxu0 %v563
  %611 = vmatprep.subr.mxu0 0.0
  %612 = vmatpush1.xpose.msra.mxu0 %v566
  %613 = vmatprep.subr.mxu0 0.0
  %614 = vmatpush1.xpose.msra.mxu0 %v569
  %615 = vmatprep.subr.mxu0 0.0
  %616 = vmatpush1.xpose.msra.mxu0 %v572
  %617 = vmatprep.subr.mxu0 0.0
  %618 = vmatpush1.xpose.msra.mxu0 %v575
  %619 = vmatprep.subr.mxu0 0.0
  %620 = vmatpush1.xpose.msra.mxu0 %v578
  %621 = vmatprep.subr.mxu0 0.0
  %622 = vmatpush1.xpose.msra.mxu0 %v581
  %623 = vmatprep.subr.mxu0 0.0
  %624 = vmatpush1.xpose.msra.mxu0 %v584
  %625 = vmatprep.subr.mxu0 0.0
  %626 = vmatpush1.xpose.msra.mxu0 %v587
  %627 = vmatprep.subr.mxu0 0.0
  %628 = vmatpush1.xpose.msra.mxu0 %v590
  %629 = vmatprep.subr.mxu0 0.0
  %630 = vmatpush1.xpose.msra.mxu0 %v593
  %631 = vmatprep.subr.mxu0 0.0
  %632 = vmatpush1.xpose.msra.mxu0 %v596
  %633 = vmatprep.subr.mxu0 0.0
  %634 = vmatpush1.xpose.msra.mxu0 %v599
  %635 = vmatprep.subr.mxu0 0.0
  %636 = vmatpush1.xpose.msra.mxu0 %v602
  %637 = vmatprep.subr.mxu0 0.0
  %638 = vmatpush1.xpose.msra.mxu0 %v605
  %639 = vmatprep.subr.mxu0 0.0
  %640 = vmatpush1.xpose.msra.mxu0 0.0
  %641 = vmatprep.subr.mxu0 0.0
  %642 = vmatpush1.xpose.msra.mxu0 0.0
  %643 = vmatprep.subr.mxu0 0.0
  %644 = vmatpush1.xpose.msra.mxu0 0.0
  %645 = vmatprep.subr.mxu0 0.0
  %646 = vmatpush1.xpose.msra.mxu0 0.0
  %647 = vmatprep.subr.mxu0 0.0
  %648 = vmatpush1.xpose.msra.mxu0 0.0
  %649 = vmatprep.subr.mxu0 0.0
  %650 = vmatpush1.xpose.msra.mxu0 0.0
  %651 = vmatprep.subr.mxu0 0.0
  %652 = vmatpush1.xpose.msra.mxu0 0.0
  %653 = vmatprep.subr.mxu0 0.0
  %654 = vmatpush1.xpose.msra.mxu0 0.0
  %655 = vmatprep.subr.mxu0 0.0
  %656 = vmatpush1.xpose.msra.mxu0 0.0
  %657 = vmatprep.subr.mxu0 0.0
  %658 = vmatpush1.xpose.msra.mxu0 0.0
  %659 = vmatprep.subr.mxu0 0.0
  %660 = vmatpush1.xpose.msra.mxu0 0.0
  %661 = vmatprep.subr.mxu0 0.0
  %662 = vmatpush1.xpose.msra.mxu0 0.0
  %663 = vmatprep.subr.mxu0 0.0
  %664 = vmatpush1.xpose.msra.mxu0 0.0
  %665 = vmatprep.subr.mxu0 0.0
  %666 = vmatpush1.xpose.msra.mxu0 0.0
  %667 = vmatprep.subr.mxu0 0.0
  %668 = vmatpush1.xpose.msra.mxu0 0.0
  %669 = vmatprep.subr.mxu0 0.0
  %670 = vmatpush1.xpose.msra.mxu0 0.0
  %671 = vmatprep.mubr.f32.mxu0 0.0
  %672 = vmatmul.mubr.f32.gmra.mrb[0].mxu0 %v554
  %v673 = vpop.f32.mrb[0].mxu0
  %v674 = vadd.f32 %v208, %v673
  %v675 = vpop.f32.mrb[0].mxu0
  %676 = vmatprep.mubr.f32.mxu0 0.0
  %677 = vmatmul.mubr.f32.gmra.mrb[0].mxu0 %v557
  %v678 = vpop.f32.mrb[0].mxu0
  %v679 = vadd.f32 %v209, %v678
  %v680 = vpop.f32.mrb[0].mxu0
  %681 = vdwg.mxu0
  %682 = vmax.xlane.f32.xlu0 %v674
  %v683 = vpop.xlane.xlu0 %682
  %684 = vmax.xlane.f32.xlu0 %v679
  %v685 = vpop.xlane.xlu0 %684
  %v686 = vsub.f32 %v674, %v683
  %v687 = vsub.f32 %v679, %v685
  %v688 = vmul.f32 %v686, 1.442695
  %v689 = vpow.pop %v688
  %v690 = vmul.f32 %v687, 1.442695
  %v691 = vpow.pop %v690
  %692 = vmatprep.subr.mxu0 0.0
  %693 = vmatpush1.msra.mxu0 %v537
  %694 = vmatprep.subr.mxu0 0.0
  %695 = vmatpush1.msra.mxu0 %v538
  %696 = vmatprep.subr.mxu0 0.0
  %697 = vmatpush1.msra.mxu0 %v539
  %698 = vmatprep.subr.mxu0 0.0
  %699 = vmatpush1.msra.mxu0 %v540
  %700 = vmatprep.subr.mxu0 0.0
  %701 = vmatpush1.msra.mxu0 %v541
  %702 = vmatprep.subr.mxu0 0.0
  %703 = vmatpush1.msra.mxu0 %v542
  %704 = vmatprep.subr.mxu0 0.0
  %705 = vmatpush1.msra.mxu0 %v543
  %706 = vmatprep.subr.mxu0 0.0
  %707 = vmatpush1.msra.mxu0 %v544
  %708 = vmatprep.subr.mxu0 0.0
  %709 = vmatpush1.msra.mxu0 %v545
  %710 = vmatprep.subr.mxu0 0.0
  %711 = vmatpush1.msra.mxu0 %v546
  %712 = vmatprep.subr.mxu0 0.0
  %713 = vmatpush1.msra.mxu0 %v547
  %714 = vmatprep.subr.mxu0 0.0
  %715 = vmatpush1.msra.mxu0 %v548
  %716 = vmatprep.subr.mxu0 0.0
  %717 = vmatpush1.msra.mxu0 %v549
  %718 = vmatprep.subr.mxu0 0.0
  %719 = vmatpush1.msra.mxu0 %v550
  %720 = vmatprep.subr.mxu0 0.0
  %721 = vmatpush1.msra.mxu0 %v551
  %722 = vmatprep.subr.mxu0 0.0
  %723 = vmatpush1.msra.mxu0 %v552
  %724 = vmatprep.subr.mxu0 0.0
  %725 = vmatpush1.msra.mxu0 0.0
  %726 = vmatprep.subr.mxu0 0.0
  %727 = vmatpush1.msra.mxu0 0.0
  %728 = vmatprep.subr.mxu0 0.0
  %729 = vmatpush1.msra.mxu0 0.0
  %730 = vmatprep.subr.mxu0 0.0
  %731 = vmatpush1.msra.mxu0 0.0
  %732 = vmatprep.subr.mxu0 0.0
  %733 = vmatpush1.msra.mxu0 0.0
  %734 = vmatprep.subr.mxu0 0.0
  %735 = vmatpush1.msra.mxu0 0.0
  %736 = vmatprep.subr.mxu0 0.0
  %737 = vmatpush1.msra.mxu0 0.0
  %738 = vmatprep.subr.mxu0 0.0
  %739 = vmatpush1.msra.mxu0 0.0
  %740 = vmatprep.subr.mxu0 0.0
  %741 = vmatpush1.msra.mxu0 0.0
  %742 = vmatprep.subr.mxu0 0.0
  %743 = vmatpush1.msra.mxu0 0.0
  %744 = vmatprep.subr.mxu0 0.0
  %745 = vmatpush1.msra.mxu0 0.0
  %746 = vmatprep.subr.mxu0 0.0
  %747 = vmatpush1.msra.mxu0 0.0
  %748 = vmatprep.subr.mxu0 0.0
  %749 = vmatpush1.msra.mxu0 0.0
  %750 = vmatprep.subr.mxu0 0.0
  %751 = vmatpush1.msra.mxu0 0.0
  %752 = vmatprep.subr.mxu0 0.0
  %753 = vmatpush1.msra.mxu0 0.0
  %754 = vmatprep.subr.mxu0 0.0
  %755 = vmatpush1.msra.mxu0 0.0
  %756 = vmatprep.mubr.f32.mxu0 0.0
  %757 = vmatmul.mubr.f32.gmra.mrb[0].mxu0 %v689
  %v758 = vpop.f32.mrb[0].mxu0
  %v759 = vadd.f32 0.0, %v758
  %v760 = vpop.f32.mrb[0].mxu0
  %761 = vmatprep.mubr.f32.mxu0 0.0
  %762 = vmatmul.mubr.f32.gmra.mrb[0].mxu0 %v691
  %v763 = vpop.f32.mrb[0].mxu0
  %v764 = vadd.f32 0.0, %v763
  %v765 = vpop.f32.mrb[0].mxu0
  %766 = vdwg.mxu0
  %767 = vmatprep.subr.mxu0 0.0
  %768 = vmatpush1.msra.mxu0 %v210
  %769 = vmatprep.subr.mxu0 0.0
  %770 = vmatpush1.msra.mxu0 %v211
  %771 = vmatprep.subr.mxu0 0.0
  %772 = vmatpush1.msra.mxu0 %v212
  %773 = vmatprep.subr.mxu0 0.0
  %774 = vmatpush1.msra.mxu0 %v213
  %775 = vmatprep.subr.mxu0 0.0
  %776 = vmatpush1.msra.mxu0 %v214
  %777 = vmatprep.subr.mxu0 0.0
  %778 = vmatpush1.msra.mxu0 %v215
  %779 = vmatprep.subr.mxu0 0.0
  %780 = vmatpush1.msra.mxu0 %v216
  %781 = vmatprep.subr.mxu0 0.0
  %782 = vmatpush1.msra.mxu0 %v217
  %783 = vmatprep.subr.mxu0 0.0
  %784 = vmatpush1.msra.mxu0 %v218
  %785 = vmatprep.subr.mxu0 0.0
  %786 = vmatpush1.msra.mxu0 %v219
  %787 = vmatprep.subr.mxu0 0.0
  %788 = vmatpush1.msra.mxu0 %v220
  %789 = vmatprep.subr.mxu0 0.0
  %790 = vmatpush1.msra.mxu0 %v221
  %791 = vmatprep.subr.mxu0 0.0
  %792 = vmatpush1.msra.mxu0 %v222
  %793 = vmatprep.subr.mxu0 0.0
  %794 = vmatpush1.msra.mxu0 %v223
  %795 = vmatprep.subr.mxu0 0.0
  %796 = vmatpush1.msra.mxu0 %v224
  %797 = vmatprep.subr.mxu0 0.0
  %798 = vmatpush1.msra.mxu0 %v225
  %799 = vmatprep.subr.mxu0 0.0
  %800 = vmatpush1.msra.mxu0 0.0
  %801 = vmatprep.subr.mxu0 0.0
  %802 = vmatpush1.msra.mxu0 0.0
  %803 = vmatprep.subr.mxu0 0.0
  %804 = vmatpush1.msra.mxu0 0.0
  %805 = vmatprep.subr.mxu0 0.0
  %806 = vmatpush1.msra.mxu0 0.0
  %807 = vmatprep.subr.mxu0 0.0
  %808 = vmatpush1.msra.mxu0 0.0
  %809 = vmatprep.subr.mxu0 0.0
  %810 = vmatpush1.msra.mxu0 0.0
  %811 = vmatprep.subr.mxu0 0.0
  %812 = vmatpush1.msra.mxu0 0.0
  %813 = vmatprep.subr.mxu0 0.0
  %814 = vmatpush1.msra.mxu0 0.0
  %815 = vmatprep.subr.mxu0 0.0
  %816 = vmatpush1.msra.mxu0 0.0
  %817 = vmatprep.subr.mxu0 0.0
  %818 = vmatpush1.msra.mxu0 0.0
  %819 = vmatprep.subr.mxu0 0.0
  %820 = vmatpush1.msra.mxu0 0.0
  %821 = vmatprep.subr.mxu0 0.0
  %822 = vmatpush1.msra.mxu0 0.0
  %823 = vmatprep.subr.mxu0 0.0
  %824 = vmatpush1.msra.mxu0 0.0
  %825 = vmatprep.subr.mxu0 0.0
  %826 = vmatpush1.msra.mxu0 0.0
  %827 = vmatprep.subr.mxu0 0.0
  %828 = vmatpush1.msra.mxu0 0.0
  %829 = vmatprep.subr.mxu0 0.0
  %830 = vmatpush1.msra.mxu0 0.0
  %831 = vmatprep.mubr.f32.mxu0 0.0
  %832 = vmatmul.mubr.f32.gmra.mrb[0].mxu0 %v689
  %v833 = vpop.f32.mrb[0].mxu0
  %v834 = vadd.f32 0.0, %v833
  %v835 = vpop.f32.mrb[0].mxu0
  %836 = vmatprep.mubr.f32.mxu0 0.0
  %837 = vmatmul.mubr.f32.gmra.mrb[0].mxu0 %v691
  %v838 = vpop.f32.mrb[0].mxu0
  %v839 = vadd.f32 0.0, %v838
  %v840 = vpop.f32.mrb[0].mxu0
  %841 = vdwg.mxu0
  %v842 = vrcp.pop %v834
  %v843 = vrcp.pop %v839
  %v844 = vmul.f32 %v759, %v842
  %v845 = vmul.f32 %v764, %v843
  %v846 = vld [vmem:[%s9] sm:$0xff]
  %v847 = vld [vmem:[%s9 + $0x8] sm:$0xff]
  %v848 = vld [vmem:[%s9 + $0x10] sm:$0xff]
  %v849 = vld [vmem:[%s9 + $0x18] sm:$0xff]
  %v850 = vld [vmem:[%s9 + $0x20] sm:$0xff]
  %v851 = vld [vmem:[%s9 + $0x28] sm:$0xff]
  %v853 = vsel %vm228, %v844, 0
  %v856 = vsel %vm228, %v845, 0
  %858 = vmatprep.subr.mxu0 0.0
  %859 = vmatpush1.msra.mxu0 %v846
  %860 = vmatprep.subr.mxu0 0.0
  %861 = vmatpush1.msra.mxu0 %v847
  %862 = vmatprep.subr.mxu0 0.0
  %863 = vmatpush1.msra.mxu0 %v848
  %864 = vmatprep.subr.mxu0 0.0
  %865 = vmatpush1.msra.mxu0 %v849
  %866 = vmatprep.subr.mxu0 0.0
  %867 = vmatpush1.msra.mxu0 %v850
  %868 = vmatprep.subr.mxu0 0.0
  %869 = vmatpush1.msra.mxu0 %v851
  %870 = vmatprep.subr.mxu0 0.0
  %871 = vmatpush1.msra.mxu0 0.0
  %872 = vmatprep.subr.mxu0 0.0
  %873 = vmatpush1.msra.mxu0 0.0
  %874 = vmatprep.subr.mxu0 0.0
  %875 = vmatpush1.msra.mxu0 0.0
  %876 = vmatprep.subr.mxu0 0.0
  %877 = vmatpush1.msra.mxu0 0.0
  %878 = vmatprep.subr.mxu0 0.0
  %879 = vmatpush1.msra.mxu0 0.0
  %880 = vmatprep.subr.mxu0 0.0
  %881 = vmatpush1.msra.mxu0 0.0
  %882 = vmatprep.subr.mxu0 0.0
  %883 = vmatpush1.msra.mxu0 0.0
  %884 = vmatprep.subr.mxu0 0.0
  %885 = vmatpush1.msra.mxu0 0.0
  %886 = vmatprep.subr.mxu0 0.0
  %887 = vmatpush1.msra.mxu0 0.0
  %888 = vmatprep.subr.mxu0 0.0
  %889 = vmatpush1.msra.mxu0 0.0
  %890 = vmatprep.subr.mxu0 0.0
  %891 = vmatpush1.msra.mxu0 0.0
  %892 = vmatprep.subr.mxu0 0.0
  %893 = vmatpush1.msra.mxu0 0.0
  %894 = vmatprep.subr.mxu0 0.0
  %895 = vmatpush1.msra.mxu0 0.0
  %896 = vmatprep.subr.mxu0 0.0
  %897 = vmatpush1.msra.mxu0 0.0
  %898 = vmatprep.subr.mxu0 0.0
  %899 = vmatpush1.msra.mxu0 0.0
  %900 = vmatprep.subr.mxu0 0.0
  %901 = vmatpush1.msra.mxu0 0.0
  %902 = vmatprep.subr.mxu0 0.0
  %903 = vmatpush1.msra.mxu0 0.0
  %904 = vmatprep.subr.mxu0 0.0
  %905 = vmatpush1.msra.mxu0 0.0
  %906 = vmatprep.subr.mxu0 0.0
  %907 = vmatpush1.msra.mxu0 0.0
  %908 = vmatprep.subr.mxu0 0.0
  %909 = vmatpush1.msra.mxu0 0.0
  %910 = vmatprep.subr.mxu0 0.0
  %911 = vmatpush1.msra.mxu0 0.0
  %912 = vmatprep.subr.mxu0 0.0
  %913 = vmatpush1.msra.mxu0 0.0
  %914 = vmatprep.subr.mxu0 0.0
  %915 = vmatpush1.msra.mxu0 0.0
  %916 = vmatprep.subr.mxu0 0.0
  %917 = vmatpush1.msra.mxu0 0.0
  %918 = vmatprep.subr.mxu0 0.0
  %919 = vmatpush1.msra.mxu0 0.0
  %920 = vmatprep.subr.mxu0 0.0
  %921 = vmatpush1.msra.mxu0 0.0
  %922 = vmatprep.mubr.f32.mxu0 0.0
  %923 = vmatmul.mubr.f32.gmra.mrb[0].mxu0 %v853
  %v924 = vpop.f32.mrb[0].mxu0
  %v925 = vadd.f32 0.0, %v924
  %v926 = vpop.f32.mrb[0].mxu0
  %927 = vmatprep.mubr.f32.mxu0 0.0
  %928 = vmatmul.mubr.f32.gmra.mrb[0].mxu0 %v856
  %v929 = vpop.f32.mrb[0].mxu0
  %v930 = vadd.f32 0.0, %v929
  %v931 = vpop.f32.mrb[0].mxu0
  %932 = vdwg.mxu0
  %v933 = vadd.f32 %v200, %v925
  %v934 = vadd.f32 %v205, %v930
  %v935 = vld [vmem:[%s10] sm:$0x1]
  %v937 = vlaneseq
  %v938 = vshrl.u32 %v937, 7
  %v939 = vsub.s32 0, %v938
  %v940 = vrot.slane %v935, %v939
  %v942 = vadd.f32 %v933, %v940
  %v943 = vadd.f32 %v934, %v940
  %v944 = vld [vmem:[%s11] sm:$0x1]
  %v945 = vld [vmem:[%s12] sm:$0x1]
  %v946 = vsel %vm228, %v942, 0.0
  %947 = vadd.xlane.f32.xlu0 %v946
  %v948 = vpop.xlane.xlu0 %947
  %v949 = vsel %vm228, %v943, 0.0
  %950 = vadd.xlane.f32.xlu0 %v949
  %v951 = vpop.xlane.xlu0 %950
  %v952 = vmul.f32 %v948, %v235
  %v953 = vmul.f32 %v951, %v235
  %v954 = vsub.f32 %v942, %v952
  %v955 = vsub.f32 %v943, %v953
  %v956 = vmul.f32 %v954, %v954
  %v957 = vmul.f32 %v955, %v955
  %v958 = vsel %vm228, %v956, 0.0
  %959 = vadd.xlane.f32.xlu0 %v958
  %v960 = vpop.xlane.xlu0 %959
  %v961 = vsel %vm228, %v957, 0.0
  %962 = vadd.xlane.f32.xlu0 %v961
  %v963 = vpop.xlane.xlu0 %962
  %v964 = vmul.f32 %v960, %v235
  %v965 = vmul.f32 %v963, %v235
  %v966 = vadd.f32 %v964, 1e-05
  %v967 = vadd.f32 %v965, 1e-05
  %v968 = vrsqrt.pop %v966
  %v969 = vrsqrt.pop %v967
  %v970 = vmul.f32 %v954, %v968
  %v971 = vmul.f32 %v955, %v969
  %v973 = vlaneseq
  %v974 = vshrl.u32 %v973, 7
  %v975 = vsub.s32 0, %v974
  %v976 = vrot.slane %v944, %v975
  %v978 = vmul.f32 %v970, %v976
  %v979 = vmul.f32 %v971, %v976
  %v981 = vlaneseq
  %v982 = vshrl.u32 %v981, 7
  %v983 = vsub.s32 0, %v982
  %v984 = vrot.slane %v945, %v983
  %v986 = vadd.f32 %v978, %v984
  %v987 = vadd.f32 %v979, %v984
  %v988 = vld [vmem:[%s13] sm:$0xff]
  %v989 = vld [vmem:[%s13 + $0x8] sm:$0xff]
  %v990 = vld [vmem:[%s13 + $0x10] sm:$0xff]
  %v991 = vld [vmem:[%s13 + $0x18] sm:$0xff]
  %v992 = vld [vmem:[%s13 + $0x20] sm:$0xff]
  %v993 = vld [vmem:[%s13 + $0x28] sm:$0xff]
  %v994 = vld [vmem:[%s13 + $0x30] sm:$0xff]
  %v995 = vld [vmem:[%s13 + $0x38] sm:$0xff]
  %v996 = vld [vmem:[%s13 + $0x40] sm:$0xff]
  %v997 = vld [vmem:[%s13 + $0x48] sm:$0xff]
  %v998 = vld [vmem:[%s13 + $0x50] sm:$0xff]
  %v999 = vld [vmem:[%s13 + $0x58] sm:$0xff]
  %v1000 = vld [vmem:[%s14] sm:$0x3]
  %v1002 = vlaneseq
  %v1003 = vshrl.u32 %v1002, 7
  %v1004 = vsub.s32 0, %v1003
  %v1005 = vrot.slane %v1000, %v1004
  %v1006 = vlaneseq
  %v1007 = vshrl.u32 %v1006, 7
  %v1008 = vsub.s32 1, %v1007
  %v1009 = vrot.slane %v1000, %v1008
  %v1013 = vsel %vm228, %v986, 0
  %v1016 = vsel %vm228, %v987, 0
  %1018 = vmatprep.subr.mxu0 %v989
  %1019 = vmatpush1.msra.mxu0 %v988
  %1020 = vmatprep.subr.mxu0 %v991
  %1021 = vmatpush1.msra.mxu0 %v990
  %1022 = vmatprep.subr.mxu0 %v993
  %1023 = vmatpush1.msra.mxu0 %v992
  %1024 = vmatprep.subr.mxu0 %v995
  %1025 = vmatpush1.msra.mxu0 %v994
  %1026 = vmatprep.subr.mxu0 %v997
  %1027 = vmatpush1.msra.mxu0 %v996
  %1028 = vmatprep.subr.mxu0 %v999
  %1029 = vmatpush1.msra.mxu0 %v998
  %1030 = vmatprep.subr.mxu0 0.0
  %1031 = vmatpush1.msra.mxu0 0.0
  %1032 = vmatprep.subr.mxu0 0.0
  %1033 = vmatpush1.msra.mxu0 0.0
  %1034 = vmatprep.subr.mxu0 0.0
  %1035 = vmatpush1.msra.mxu0 0.0
  %1036 = vmatprep.subr.mxu0 0.0
  %1037 = vmatpush1.msra.mxu0 0.0
  %1038 = vmatprep.subr.mxu0 0.0
  %1039 = vmatpush1.msra.mxu0 0.0
  %1040 = vmatprep.subr.mxu0 0.0
  %1041 = vmatpush1.msra.mxu0 0.0
  %1042 = vmatprep.subr.mxu0 0.0
  %1043 = vmatpush1.msra.mxu0 0.0
  %1044 = vmatprep.subr.mxu0 0.0
  %1045 = vmatpush1.msra.mxu0 0.0
  %1046 = vmatprep.subr.mxu0 0.0
  %1047 = vmatpush1.msra.mxu0 0.0
  %1048 = vmatprep.subr.mxu0 0.0
  %1049 = vmatpush1.msra.mxu0 0.0
  %1050 = vmatprep.subr.mxu0 0.0
  %1051 = vmatpush1.msra.mxu0 0.0
  %1052 = vmatprep.subr.mxu0 0.0
  %1053 = vmatpush1.msra.mxu0 0.0
  %1054 = vmatprep.subr.mxu0 0.0
  %1055 = vmatpush1.msra.mxu0 0.0
  %1056 = vmatprep.subr.mxu0 0.0
  %1057 = vmatpush1.msra.mxu0 0.0
  %1058 = vmatprep.subr.mxu0 0.0
  %1059 = vmatpush1.msra.mxu0 0.0
  %1060 = vmatprep.subr.mxu0 0.0
  %1061 = vmatpush1.msra.mxu0 0.0
  %1062 = vmatprep.subr.mxu0 0.0
  %1063 = vmatpush1.msra.mxu0 0.0
  %1064 = vmatprep.subr.mxu0 0.0
  %1065 = vmatpush1.msra.mxu0 0.0
  %1066 = vmatprep.subr.mxu0 0.0
  %1067 = vmatpush1.msra.mxu0 0.0
  %1068 = vmatprep.subr.mxu0 0.0
  %1069 = vmatpush1.msra.mxu0 0.0
  %1070 = vmatprep.subr.mxu0 0.0
  %1071 = vmatpush1.msra.mxu0 0.0
  %1072 = vmatprep.subr.mxu0 0.0
  %1073 = vmatpush1.msra.mxu0 0.0
  %1074 = vmatprep.subr.mxu0 0.0
  %1075 = vmatpush1.msra.mxu0 0.0
  %1076 = vmatprep.subr.mxu0 0.0
  %1077 = vmatpush1.msra.mxu0 0.0
  %1078 = vmatprep.subr.mxu0 0.0
  %1079 = vmatpush1.msra.mxu0 0.0
  %1080 = vmatprep.subr.mxu0 0.0
  %1081 = vmatpush1.msra.mxu0 0.0
  %1082 = vmatprep.mubr.f32.mxu0 0.0
  %1083 = vmatmul.mubr.f32.gmra.mrb[0].mxu0 %v1013
  %v1084 = vpop.f32.mrb[0].mxu0
  %v1085 = vadd.f32 %v1005, %v1084
  %v1086 = vpop.f32.mrb[0].mxu0
  %v1087 = vadd.f32 %v1009, %v1086
  %1088 = vmatprep.mubr.f32.mxu0 0.0
  %1089 = vmatmul.mubr.f32.gmra.mrb[0].mxu0 %v1016
  %v1090 = vpop.f32.mrb[0].mxu0
  %v1091 = vadd.f32 %v1005, %v1090
  %v1092 = vpop.f32.mrb[0].mxu0
  %v1093 = vadd.f32 %v1009, %v1092
  %1094 = vdwg.mxu0
  %v1095 = vmax.f32 %v1085, 0.0
  %v1096 = vmax.f32 %v1087, 0.0
  %v1097 = vmax.f32 %v1091, 0.0
  %v1098 = vmax.f32 %v1093, 0.0
  %v1099 = vld [vmem:[%s15] sm:$0xff]
  %v1100 = vld [vmem:[%s15 + $0x8] sm:$0xff]
  %v1101 = vld [vmem:[%s15 + $0x10] sm:$0xff]
  %v1102 = vld [vmem:[%s15 + $0x18] sm:$0xff]
  %v1103 = vld [vmem:[%s15 + $0x20] sm:$0xff]
  %v1104 = vld [vmem:[%s15 + $0x28] sm:$0xff]
  %v1105 = vld [vmem:[%s15 + $0x30] sm:$0xff]
  %v1106 = vld [vmem:[%s15 + $0x38] sm:$0xff]
  %v1107 = vld [vmem:[%s15 + $0x40] sm:$0xff]
  %v1108 = vld [vmem:[%s15 + $0x48] sm:$0xff]
  %v1109 = vld [vmem:[%s15 + $0x50] sm:$0xff]
  %v1110 = vld [vmem:[%s15 + $0x58] sm:$0xff]
  %v1111 = vld [vmem:[%s15 + $0x60] sm:$0xff]
  %v1112 = vld [vmem:[%s15 + $0x68] sm:$0xff]
  %v1113 = vld [vmem:[%s15 + $0x70] sm:$0xff]
  %v1114 = vld [vmem:[%s15 + $0x78] sm:$0xff]
  %v1115 = vld [vmem:[%s15 + $0x80] sm:$0xff]
  %v1116 = vld [vmem:[%s15 + $0x88] sm:$0xff]
  %v1117 = vld [vmem:[%s15 + $0x90] sm:$0xff]
  %v1118 = vld [vmem:[%s15 + $0x98] sm:$0xff]
  %v1119 = vld [vmem:[%s15 + $0xa0] sm:$0xff]
  %v1120 = vld [vmem:[%s15 + $0xa8] sm:$0xff]
  %v1121 = vld [vmem:[%s15 + $0xb0] sm:$0xff]
  %v1122 = vld [vmem:[%s15 + $0xb8] sm:$0xff]
  %vm1123 = vcmask 523264
  %v1125 = vsel %vm1123, %v1096, 0
  %v1128 = vsel %vm1123, %v1098, 0
  %1130 = vmatprep.subr.mxu0 0.0
  %1131 = vmatpush1.msra.mxu0 %v1099
  %1132 = vmatprep.subr.mxu0 0.0
  %1133 = vmatpush1.msra.mxu0 %v1100
  %1134 = vmatprep.subr.mxu0 0.0
  %1135 = vmatpush1.msra.mxu0 %v1101
  %1136 = vmatprep.subr.mxu0 0.0
  %1137 = vmatpush1.msra.mxu0 %v1102
  %1138 = vmatprep.subr.mxu0 0.0
  %1139 = vmatpush1.msra.mxu0 %v1103
  %1140 = vmatprep.subr.mxu0 0.0
  %1141 = vmatpush1.msra.mxu0 %v1104
  %1142 = vmatprep.subr.mxu0 0.0
  %1143 = vmatpush1.msra.mxu0 %v1105
  %1144 = vmatprep.subr.mxu0 0.0
  %1145 = vmatpush1.msra.mxu0 %v1106
  %1146 = vmatprep.subr.mxu0 0.0
  %1147 = vmatpush1.msra.mxu0 %v1107
  %1148 = vmatprep.subr.mxu0 0.0
  %1149 = vmatpush1.msra.mxu0 %v1108
  %1150 = vmatprep.subr.mxu0 0.0
  %1151 = vmatpush1.msra.mxu0 %v1109
  %1152 = vmatprep.subr.mxu0 0.0
  %1153 = vmatpush1.msra.mxu0 %v1110
  %1154 = vmatprep.subr.mxu0 0.0
  %1155 = vmatpush1.msra.mxu0 %v1111
  %1156 = vmatprep.subr.mxu0 0.0
  %1157 = vmatpush1.msra.mxu0 %v1112
  %1158 = vmatprep.subr.mxu0 0.0
  %1159 = vmatpush1.msra.mxu0 %v1113
  %1160 = vmatprep.subr.mxu0 0.0
  %1161 = vmatpush1.msra.mxu0 %v1114
  %1162 = vmatprep.subr.mxu0 0.0
  %1163 = vmatpush1.msra.mxu0 %v1115
  %1164 = vmatprep.subr.mxu0 0.0
  %1165 = vmatpush1.msra.mxu0 %v1116
  %1166 = vmatprep.subr.mxu0 0.0
  %1167 = vmatpush1.msra.mxu0 %v1117
  %1168 = vmatprep.subr.mxu0 0.0
  %1169 = vmatpush1.msra.mxu0 %v1118
  %1170 = vmatprep.subr.mxu0 0.0
  %1171 = vmatpush1.msra.mxu0 %v1119
  %1172 = vmatprep.subr.mxu0 0.0
  %1173 = vmatpush1.msra.mxu0 %v1120
  %1174 = vmatprep.subr.mxu0 0.0
  %1175 = vmatpush1.msra.mxu0 %v1121
  %1176 = vmatprep.subr.mxu0 0.0
  %1177 = vmatpush1.msra.mxu0 %v1122
  %1178 = vmatprep.subr.mxu0 0.0
  %1179 = vmatpush1.msra.mxu0 0.0
  %1180 = vmatprep.subr.mxu0 0.0
  %1181 = vmatpush1.msra.mxu0 0.0
  %1182 = vmatprep.subr.mxu0 0.0
  %1183 = vmatpush1.msra.mxu0 0.0
  %1184 = vmatprep.subr.mxu0 0.0
  %1185 = vmatpush1.msra.mxu0 0.0
  %1186 = vmatprep.subr.mxu0 0.0
  %1187 = vmatpush1.msra.mxu0 0.0
  %1188 = vmatprep.subr.mxu0 0.0
  %1189 = vmatpush1.msra.mxu0 0.0
  %1190 = vmatprep.subr.mxu0 0.0
  %1191 = vmatpush1.msra.mxu0 0.0
  %1192 = vmatprep.subr.mxu0 0.0
  %1193 = vmatpush1.msra.mxu0 0.0
  %1194 = vmatprep.mubr.f32.mxu0 %v1125
  %1195 = vmatmul.mubr.f32.gmra.mrb[0].mxu0 %v1095
  %v1196 = vpop.f32.mrb[0].mxu0
  %v1197 = vadd.f32 0.0, %v1196
  %v1198 = vpop.f32.mrb[0].mxu0
  %1199 = vmatprep.mubr.f32.mxu0 %v1128
  %1200 = vmatmul.mubr.f32.gmra.mrb[0].mxu0 %v1097
  %v1201 = vpop.f32.mrb[0].mxu0
  %v1202 = vadd.f32 0.0, %v1201
  %v1203 = vpop.f32.mrb[0].mxu0
  %1204 = vdwg.mxu0
  %v1205 = vadd.f32 %v942, %v1197
  %v1206 = vadd.f32 %v943, %v1202
  %v1207 = vld [vmem:[%s16] sm:$0x1]
  %v1209 = vlaneseq
  %v1210 = vshrl.u32 %v1209, 7
  %v1211 = vsub.s32 0, %v1210
  %v1212 = vrot.slane %v1207, %v1211
  %v1214 = vadd.f32 %v1205, %v1212
  %v1215 = vadd.f32 %v1206, %v1212
  %s1216 = scalar_lea.vmem %s4, 1
  %v1217 = vld [vmem:[%s1216] sm:$0x1]
  %s1218 = scalar_lea.vmem %s5, 1
  %v1219 = vld [vmem:[%s1218] sm:$0x1]
  %v1220 = vsel %vm228, %v1214, 0.0
  %1221 = vadd.xlane.f32.xlu0 %v1220
  %v1222 = vpop.xlane.xlu0 %1221
  %v1223 = vsel %vm228, %v1215, 0.0
  %1224 = vadd.xlane.f32.xlu0 %v1223
  %v1225 = vpop.xlane.xlu0 %1224
  %v1226 = vmul.f32 %v1222, %v235
  %v1227 = vmul.f32 %v1225, %v235
  %v1228 = vsub.f32 %v1214, %v1226
  %v1229 = vsub.f32 %v1215, %v1227
  %v1230 = vmul.f32 %v1228, %v1228
  %v1231 = vmul.f32 %v1229, %v1229
  %v1232 = vsel %vm228, %v1230, 0.0
  %1233 = vadd.xlane.f32.xlu0 %v1232
  %v1234 = vpop.xlane.xlu0 %1233
  %v1235 = vsel %vm228, %v1231, 0.0
  %1236 = vadd.xlane.f32.xlu0 %v1235
  %v1237 = vpop.xlane.xlu0 %1236
  %v1238 = vmul.f32 %v1234, %v235
  %v1239 = vmul.f32 %v1237, %v235
  %v1240 = vadd.f32 %v1238, 1e-05
  %v1241 = vadd.f32 %v1239, 1e-05
  %v1242 = vrsqrt.pop %v1240
  %v1243 = vrsqrt.pop %v1241
  %v1244 = vmul.f32 %v1228, %v1242
  %v1245 = vmul.f32 %v1229, %v1243
  %v1247 = vlaneseq
  %v1248 = vshrl.u32 %v1247, 7
  %v1249 = vsub.s32 0, %v1248
  %v1250 = vrot.slane %v1217, %v1249
  %v1252 = vmul.f32 %v1244, %v1250
  %v1253 = vmul.f32 %v1245, %v1250
  %v1255 = vlaneseq
  %v1256 = vshrl.u32 %v1255, 7
  %v1257 = vsub.s32 0, %v1256
  %v1258 = vrot.slane %v1219, %v1257
  %v1260 = vadd.f32 %v1252, %v1258
  %v1261 = vadd.f32 %v1253, %v1258
  %s1262 = scalar_lea.vmem %s6, 48
  %v1263 = vld [vmem:[%s1262] sm:$0xff]
  %v1264 = vld [vmem:[%s1262 + $0x8] sm:$0xff]
  %v1265 = vld [vmem:[%s1262 + $0x10] sm:$0xff]
  %v1266 = vld [vmem:[%s1262 + $0x18] sm:$0xff]
  %v1267 = vld [vmem:[%s1262 + $0x20] sm:$0xff]
  %v1268 = vld [vmem:[%s1262 + $0x28] sm:$0xff]
  %v1270 = vsel %vm228, %v1260, 0
  %v1273 = vsel %vm228, %v1261, 0
  %1275 = vmatprep.subr.mxu0 0.0
  %1276 = vmatpush1.msra.mxu0 %v1263
  %1277 = vmatprep.subr.mxu0 0.0
  %1278 = vmatpush1.msra.mxu0 %v1264
  %1279 = vmatprep.subr.mxu0 0.0
  %1280 = vmatpush1.msra.mxu0 %v1265
  %1281 = vmatprep.subr.mxu0 0.0
  %1282 = vmatpush1.msra.mxu0 %v1266
  %1283 = vmatprep.subr.mxu0 0.0
  %1284 = vmatpush1.msra.mxu0 %v1267
  %1285 = vmatprep.subr.mxu0 0.0
  %1286 = vmatpush1.msra.mxu0 %v1268
  %1287 = vmatprep.subr.mxu0 0.0
  %1288 = vmatpush1.msra.mxu0 0.0
  %1289 = vmatprep.subr.mxu0 0.0
  %1290 = vmatpush1.msra.mxu0 0.0
  %1291 = vmatprep.subr.mxu0 0.0
  %1292 = vmatpush1.msra.mxu0 0.0
  %1293 = vmatprep.subr.mxu0 0.0
  %1294 = vmatpush1.msra.mxu0 0.0
  %1295 = vmatprep.subr.mxu0 0.0
  %1296 = vmatpush1.msra.mxu0 0.0
  %1297 = vmatprep.subr.mxu0 0.0
  %1298 = vmatpush1.msra.mxu0 0.0
  %1299 = vmatprep.subr.mxu0 0.0
  %1300 = vmatpush1.msra.mxu0 0.0
  %1301 = vmatprep.subr.mxu0 0.0
  %1302 = vmatpush1.msra.mxu0 0.0
  %1303 = vmatprep.subr.mxu0 0.0
  %1304 = vmatpush1.msra.mxu0 0.0
  %1305 = vmatprep.subr.mxu0 0.0
  %1306 = vmatpush1.msra.mxu0 0.0
  %1307 = vmatprep.subr.mxu0 0.0
  %1308 = vmatpush1.msra.mxu0 0.0
  %1309 = vmatprep.subr.mxu0 0.0
  %1310 = vmatpush1.msra.mxu0 0.0
  %1311 = vmatprep.subr.mxu0 0.0
  %1312 = vmatpush1.msra.mxu0 0.0
  %1313 = vmatprep.subr.mxu0 0.0
  %1314 = vmatpush1.msra.mxu0 0.0
  %1315 = vmatprep.subr.mxu0 0.0
  %1316 = vmatpush1.msra.mxu0 0.0
  %1317 = vmatprep.subr.mxu0 0.0
  %1318 = vmatpush1.msra.mxu0 0.0
  %1319 = vmatprep.subr.mxu0 0.0
  %1320 = vmatpush1.msra.mxu0 0.0
  %1321 = vmatprep.subr.mxu0 0.0
  %1322 = vmatpush1.msra.mxu0 0.0
  %1323 = vmatprep.subr.mxu0 0.0
  %1324 = vmatpush1.msra.mxu0 0.0
  %1325 = vmatprep.subr.mxu0 0.0
  %1326 = vmatpush1.msra.mxu0 0.0
  %1327 = vmatprep.subr.mxu0 0.0
  %1328 = vmatpush1.msra.mxu0 0.0
  %1329 = vmatprep.subr.mxu0 0.0
  %1330 = vmatpush1.msra.mxu0 0.0
  %1331 = vmatprep.subr.mxu0 0.0
  %1332 = vmatpush1.msra.mxu0 0.0
  %1333 = vmatprep.subr.mxu0 0.0
  %1334 = vmatpush1.msra.mxu0 0.0
  %1335 = vmatprep.subr.mxu0 0.0
  %1336 = vmatpush1.msra.mxu0 0.0
  %1337 = vmatprep.subr.mxu0 0.0
  %1338 = vmatpush1.msra.mxu0 0.0
  %1339 = vmatprep.mubr.f32.mxu0 0.0
  %1340 = vmatmul.mubr.f32.gmra.mrb[0].mxu0 %v1270
  %v1341 = vpop.f32.mrb[0].mxu0
  %v1342 = vadd.f32 0.0, %v1341
  %v1343 = vpop.f32.mrb[0].mxu0
  %1344 = vmatprep.mubr.f32.mxu0 0.0
  %1345 = vmatmul.mubr.f32.gmra.mrb[0].mxu0 %v1273
  %v1346 = vpop.f32.mrb[0].mxu0
  %v1347 = vadd.f32 0.0, %v1346
  %v1348 = vpop.f32.mrb[0].mxu0
  %1349 = vdwg.mxu0
  %s1350 = scalar_lea.vmem %s7, 48
  %v1351 = vld [vmem:[%s1350] sm:$0xff]
  %v1352 = vld [vmem:[%s1350 + $0x8] sm:$0xff]
  %v1353 = vld [vmem:[%s1350 + $0x10] sm:$0xff]
  %v1354 = vld [vmem:[%s1350 + $0x18] sm:$0xff]
  %v1355 = vld [vmem:[%s1350 + $0x20] sm:$0xff]
  %v1356 = vld [vmem:[%s1350 + $0x28] sm:$0xff]
  %1357 = vmatprep.subr.mxu0 0.0
  %1358 = vmatpush1.msra.mxu0 %v1351
  %1359 = vmatprep.subr.mxu0 0.0
  %1360 = vmatpush1.msra.mxu0 %v1352
  %1361 = vmatprep.subr.mxu0 0.0
  %1362 = vmatpush1.msra.mxu0 %v1353
  %1363 = vmatprep.subr.mxu0 0.0
  %1364 = vmatpush1.msra.mxu0 %v1354
  %1365 = vmatprep.subr.mxu0 0.0
  %1366 = vmatpush1.msra.mxu0 %v1355
  %1367 = vmatprep.subr.mxu0 0.0
  %1368 = vmatpush1.msra.mxu0 %v1356
  %1369 = vmatprep.subr.mxu0 0.0
  %1370 = vmatpush1.msra.mxu0 0.0
  %1371 = vmatprep.subr.mxu0 0.0
  %1372 = vmatpush1.msra.mxu0 0.0
  %1373 = vmatprep.subr.mxu0 0.0
  %1374 = vmatpush1.msra.mxu0 0.0
  %1375 = vmatprep.subr.mxu0 0.0
  %1376 = vmatpush1.msra.mxu0 0.0
  %1377 = vmatprep.subr.mxu0 0.0
  %1378 = vmatpush1.msra.mxu0 0.0
  %1379 = vmatprep.subr.mxu0 0.0
  %1380 = vmatpush1.msra.mxu0 0.0
  %1381 = vmatprep.subr.mxu0 0.0
  %1382 = vmatpush1.msra.mxu0 0.0
  %1383 = vmatprep.subr.mxu0 0.0
  %1384 = vmatpush1.msra.mxu0 0.0
  %1385 = vmatprep.subr.mxu0 0.0
  %1386 = vmatpush1.msra.mxu0 0.0
  %1387 = vmatprep.subr.mxu0 0.0
  %1388 = vmatpush1.msra.mxu0 0.0
  %1389 = vmatprep.subr.mxu0 0.0
  %1390 = vmatpush1.msra.mxu0 0.0
  %1391 = vmatprep.subr.mxu0 0.0
  %1392 = vmatpush1.msra.mxu0 0.0
  %1393 = vmatprep.subr.mxu0 0.0
  %1394 = vmatpush1.msra.mxu0 0.0
  %1395 = vmatprep.subr.mxu0 0.0
  %1396 = vmatpush1.msra.mxu0 0.0
  %1397 = vmatprep.subr.mxu0 0.0
  %1398 = vmatpush1.msra.mxu0 0.0
  %1399 = vmatprep.subr.mxu0 0.0
  %1400 = vmatpush1.msra.mxu0 0.0
  %1401 = vmatprep.subr.mxu0 0.0
  %1402 = vmatpush1.msra.mxu0 0.0
  %1403 = vmatprep.subr.mxu0 0.0
  %1404 = vmatpush1.msra.mxu0 0.0
  %1405 = vmatprep.subr.mxu0 0.0
  %1406 = vmatpush1.msra.mxu0 0.0
  %1407 = vmatprep.subr.mxu0 0.0
  %1408 = vmatpush1.msra.mxu0 0.0
  %1409 = vmatprep.subr.mxu0 0.0
  %1410 = vmatpush1.msra.mxu0 0.0
  %1411 = vmatprep.subr.mxu0 0.0
  %1412 = vmatpush1.msra.mxu0 0.0
  %1413 = vmatprep.subr.mxu0 0.0
  %1414 = vmatpush1.msra.mxu0 0.0
  %1415 = vmatprep.subr.mxu0 0.0
  %1416 = vmatpush1.msra.mxu0 0.0
  %1417 = vmatprep.subr.mxu0 0.0
  %1418 = vmatpush1.msra.mxu0 0.0
  %1419 = vmatprep.subr.mxu0 0.0
  %1420 = vmatpush1.msra.mxu0 0.0
  %1421 = vmatprep.mubr.f32.mxu0 0.0
  %1422 = vmatmul.mubr.f32.gmra.mrb[0].mxu0 %v1270
  %v1423 = vpop.f32.mrb[0].mxu0
  %v1424 = vadd.f32 0.0, %v1423
  %v1425 = vpop.f32.mrb[0].mxu0
  %1426 = vmatprep.mubr.f32.mxu0 0.0
  %1427 = vmatmul.mubr.f32.gmra.mrb[0].mxu0 %v1273
  %v1428 = vpop.f32.mrb[0].mxu0
  %v1429 = vadd.f32 0.0, %v1428
  %v1430 = vpop.f32.mrb[0].mxu0
  %1431 = vdwg.mxu0
  %s1432 = scalar_lea.vmem %s8, 48
  %v1433 = vld [vmem:[%s1432] sm:$0xff]
  %v1434 = vld [vmem:[%s1432 + $0x8] sm:$0xff]
  %v1435 = vld [vmem:[%s1432 + $0x10] sm:$0xff]
  %v1436 = vld [vmem:[%s1432 + $0x18] sm:$0xff]
  %v1437 = vld [vmem:[%s1432 + $0x20] sm:$0xff]
  %v1438 = vld [vmem:[%s1432 + $0x28] sm:$0xff]
  %1439 = vmatprep.subr.mxu0 0.0
  %1440 = vmatpush1.msra.mxu0 %v1433
  %1441 = vmatprep.subr.mxu0 0.0
  %1442 = vmatpush1.msra.mxu0 %v1434
  %1443 = vmatprep.subr.mxu0 0.0
  %1444 = vmatpush1.msra.mxu0 %v1435
  %1445 = vmatprep.subr.mxu0 0.0
  %1446 = vmatpush1.msra.mxu0 %v1436
  %1447 = vmatprep.subr.mxu0 0.0
  %1448 = vmatpush1.msra.mxu0 %v1437
  %1449 = vmatprep.subr.mxu0 0.0
  %1450 = vmatpush1.msra.mxu0 %v1438
  %1451 = vmatprep.subr.mxu0 0.0
  %1452 = vmatpush1.msra.mxu0 0.0
  %1453 = vmatprep.subr.mxu0 0.0
  %1454 = vmatpush1.msra.mxu0 0.0
  %1455 = vmatprep.subr.mxu0 0.0
  %1456 = vmatpush1.msra.mxu0 0.0
  %1457 = vmatprep.subr.mxu0 0.0
  %1458 = vmatpush1.msra.mxu0 0.0
  %1459 = vmatprep.subr.mxu0 0.0
  %1460 = vmatpush1.msra.mxu0 0.0
  %1461 = vmatprep.subr.mxu0 0.0
  %1462 = vmatpush1.msra.mxu0 0.0
  %1463 = vmatprep.subr.mxu0 0.0
  %1464 = vmatpush1.msra.mxu0 0.0
  %1465 = vmatprep.subr.mxu0 0.0
  %1466 = vmatpush1.msra.mxu0 0.0
  %1467 = vmatprep.subr.mxu0 0.0
  %1468 = vmatpush1.msra.mxu0 0.0
  %1469 = vmatprep.subr.mxu0 0.0
  %1470 = vmatpush1.msra.mxu0 0.0
  %1471 = vmatprep.subr.mxu0 0.0
  %1472 = vmatpush1.msra.mxu0 0.0
  %1473 = vmatprep.subr.mxu0 0.0
  %1474 = vmatpush1.msra.mxu0 0.0
  %1475 = vmatprep.subr.mxu0 0.0
  %1476 = vmatpush1.msra.mxu0 0.0
  %1477 = vmatprep.subr.mxu0 0.0
  %1478 = vmatpush1.msra.mxu0 0.0
  %1479 = vmatprep.subr.mxu0 0.0
  %1480 = vmatpush1.msra.mxu0 0.0
  %1481 = vmatprep.subr.mxu0 0.0
  %1482 = vmatpush1.msra.mxu0 0.0
  %1483 = vmatprep.subr.mxu0 0.0
  %1484 = vmatpush1.msra.mxu0 0.0
  %1485 = vmatprep.subr.mxu0 0.0
  %1486 = vmatpush1.msra.mxu0 0.0
  %1487 = vmatprep.subr.mxu0 0.0
  %1488 = vmatpush1.msra.mxu0 0.0
  %1489 = vmatprep.subr.mxu0 0.0
  %1490 = vmatpush1.msra.mxu0 0.0
  %1491 = vmatprep.subr.mxu0 0.0
  %1492 = vmatpush1.msra.mxu0 0.0
  %1493 = vmatprep.subr.mxu0 0.0
  %1494 = vmatpush1.msra.mxu0 0.0
  %1495 = vmatprep.subr.mxu0 0.0
  %1496 = vmatpush1.msra.mxu0 0.0
  %1497 = vmatprep.subr.mxu0 0.0
  %1498 = vmatpush1.msra.mxu0 0.0
  %1499 = vmatprep.subr.mxu0 0.0
  %1500 = vmatpush1.msra.mxu0 0.0
  %1501 = vmatprep.subr.mxu0 0.0
  %1502 = vmatpush1.msra.mxu0 0.0
  %1503 = vmatprep.mubr.f32.mxu0 0.0
  %1504 = vmatmul.mubr.f32.gmra.mrb[0].mxu0 %v1270
  %v1505 = vpop.f32.mrb[0].mxu0
  %v1506 = vadd.f32 0.0, %v1505
  %v1507 = vpop.f32.mrb[0].mxu0
  %1508 = vmatprep.mubr.f32.mxu0 0.0
  %1509 = vmatmul.mubr.f32.gmra.mrb[0].mxu0 %v1273
  %v1510 = vpop.f32.mrb[0].mxu0
  %v1511 = vadd.f32 0.0, %v1510
  %v1512 = vpop.f32.mrb[0].mxu0
  %1513 = vdwg.mxu0
  %v1514 = vmul.f32 %v1424, %v210
  %v1515 = vmul.f32 %v1429, %v211
  %v1516 = vmul.f32 %v1424, %v212
  %v1517 = vmul.f32 %v1429, %v213
  %v1518 = vmul.f32 %v1424, %v214
  %v1519 = vmul.f32 %v1429, %v215
  %v1520 = vmul.f32 %v1424, %v216
  %v1521 = vmul.f32 %v1429, %v217
  %v1522 = vmul.f32 %v1424, %v218
  %v1523 = vmul.f32 %v1429, %v219
  %v1524 = vmul.f32 %v1424, %v220
  %v1525 = vmul.f32 %v1429, %v221
  %v1526 = vmul.f32 %v1424, %v222
  %v1527 = vmul.f32 %v1429, %v223
  %v1528 = vmul.f32 %v1424, %v224
  %v1529 = vmul.f32 %v1429, %v225
  %v1530 = vmul.f32 %v1506, %v210
  %v1531 = vmul.f32 %v1511, %v211
  %v1532 = vmul.f32 %v1506, %v212
  %v1533 = vmul.f32 %v1511, %v213
  %v1534 = vmul.f32 %v1506, %v214
  %v1535 = vmul.f32 %v1511, %v215
  %v1536 = vmul.f32 %v1506, %v216
  %v1537 = vmul.f32 %v1511, %v217
  %v1538 = vmul.f32 %v1506, %v218
  %v1539 = vmul.f32 %v1511, %v219
  %v1540 = vmul.f32 %v1506, %v220
  %v1541 = vmul.f32 %v1511, %v221
  %v1542 = vmul.f32 %v1506, %v222
  %v1543 = vmul.f32 %v1511, %v223
  %v1544 = vmul.f32 %v1506, %v224
  %v1545 = vmul.f32 %v1511, %v225
  %v1547 = vsel %vm228, %v1342, 0
  %v1550 = vsel %vm228, %v1347, 0
  %v1553 = vsel %vm228, %v1514, 0
  %v1556 = vsel %vm228, %v1515, 0
  %v1559 = vsel %vm228, %v1516, 0
  %v1562 = vsel %vm228, %v1517, 0
  %v1565 = vsel %vm228, %v1518, 0
  %v1568 = vsel %vm228, %v1519, 0
  %v1571 = vsel %vm228, %v1520, 0
  %v1574 = vsel %vm228, %v1521, 0
  %v1577 = vsel %vm228, %v1522, 0
  %v1580 = vsel %vm228, %v1523, 0
  %v1583 = vsel %vm228, %v1524, 0
  %v1586 = vsel %vm228, %v1525, 0
  %v1589 = vsel %vm228, %v1526, 0
  %v1592 = vsel %vm228, %v1527, 0
  %v1595 = vsel %vm228, %v1528, 0
  %v1598 = vsel %vm228, %v1529, 0
  %1600 = vmatprep.subr.mxu0 0.0
  %1601 = vmatpush1.xpose.msra.mxu0 %v1553
  %1602 = vmatprep.subr.mxu0 0.0
  %1603 = vmatpush1.xpose.msra.mxu0 %v1556
  %1604 = vmatprep.subr.mxu0 0.0
  %1605 = vmatpush1.xpose.msra.mxu0 %v1559
  %1606 = vmatprep.subr.mxu0 0.0
  %1607 = vmatpush1.xpose.msra.mxu0 %v1562
  %1608 = vmatprep.subr.mxu0 0.0
  %1609 = vmatpush1.xpose.msra.mxu0 %v1565
  %1610 = vmatprep.subr.mxu0 0.0
  %1611 = vmatpush1.xpose.msra.mxu0 %v1568
  %1612 = vmatprep.subr.mxu0 0.0
  %1613 = vmatpush1.xpose.msra.mxu0 %v1571
  %1614 = vmatprep.subr.mxu0 0.0
  %1615 = vmatpush1.xpose.msra.mxu0 %v1574
  %1616 = vmatprep.subr.mxu0 0.0
  %1617 = vmatpush1.xpose.msra.mxu0 %v1577
  %1618 = vmatprep.subr.mxu0 0.0
  %1619 = vmatpush1.xpose.msra.mxu0 %v1580
  %1620 = vmatprep.subr.mxu0 0.0
  %1621 = vmatpush1.xpose.msra.mxu0 %v1583
  %1622 = vmatprep.subr.mxu0 0.0
  %1623 = vmatpush1.xpose.msra.mxu0 %v1586
  %1624 = vmatprep.subr.mxu0 0.0
  %1625 = vmatpush1.xpose.msra.mxu0 %v1589
  %1626 = vmatprep.subr.mxu0 0.0
  %1627 = vmatpush1.xpose.msra.mxu0 %v1592
  %1628 = vmatprep.subr.mxu0 0.0
  %1629 = vmatpush1.xpose.msra.mxu0 %v1595
  %1630 = vmatprep.subr.mxu0 0.0
  %1631 = vmatpush1.xpose.msra.mxu0 %v1598
  %1632 = vmatprep.subr.mxu0 0.0
  %1633 = vmatpush1.xpose.msra.mxu0 0.0
  %1634 = vmatprep.subr.mxu0 0.0
  %1635 = vmatpush1.xpose.msra.mxu0 0.0
  %1636 = vmatprep.subr.mxu0 0.0
  %1637 = vmatpush1.xpose.msra.mxu0 0.0
  %1638 = vmatprep.subr.mxu0 0.0
  %1639 = vmatpush1.xpose.msra.mxu0 0.0
  %1640 = vmatprep.subr.mxu0 0.0
  %1641 = vmatpush1.xpose.msra.mxu0 0.0
  %1642 = vmatprep.subr.mxu0 0.0
  %1643 = vmatpush1.xpose.msra.mxu0 0.0
  %1644 = vmatprep.subr.mxu0 0.0
  %1645 = vmatpush1.xpose.msra.mxu0 0.0
  %1646 = vmatprep.subr.mxu0 0.0
  %1647 = vmatpush1.xpose.msra.mxu0 0.0
  %1648 = vmatprep.subr.mxu0 0.0
  %1649 = vmatpush1.xpose.msra.mxu0 0.0
  %1650 = vmatprep.subr.mxu0 0.0
  %1651 = vmatpush1.xpose.msra.mxu0 0.0
  %1652 = vmatprep.subr.mxu0 0.0
  %1653 = vmatpush1.xpose.msra.mxu0 0.0
  %1654 = vmatprep.subr.mxu0 0.0
  %1655 = vmatpush1.xpose.msra.mxu0 0.0
  %1656 = vmatprep.subr.mxu0 0.0
  %1657 = vmatpush1.xpose.msra.mxu0 0.0
  %1658 = vmatprep.subr.mxu0 0.0
  %1659 = vmatpush1.xpose.msra.mxu0 0.0
  %1660 = vmatprep.subr.mxu0 0.0
  %1661 = vmatpush1.xpose.msra.mxu0 0.0
  %1662 = vmatprep.subr.mxu0 0.0
  %1663 = vmatpush1.xpose.msra.mxu0 0.0
  %1664 = vmatprep.mubr.f32.mxu0 0.0
  %1665 = vmatmul.mubr.f32.gmra.mrb[0].mxu0 %v1547
  %v1666 = vpop.f32.mrb[0].mxu0
  %v1667 = vadd.f32 %v208, %v1666
  %v1668 = vpop.f32.mrb[0].mxu0
  %1669 = vmatprep.mubr.f32.mxu0 0.0
  %1670 = vmatmul.mubr.f32.gmra.mrb[0].mxu0 %v1550
  %v1671 = vpop.f32.mrb[0].mxu0
  %v1672 = vadd.f32 %v209, %v1671
  %v1673 = vpop.f32.mrb[0].mxu0
  %1674 = vdwg.mxu0
  %1675 = vmax.xlane.f32.xlu0 %v1667
  %v1676 = vpop.xlane.xlu0 %1675
  %1677 = vmax.xlane.f32.xlu0 %v1672
  %v1678 = vpop.xlane.xlu0 %1677
  %v1679 = vsub.f32 %v1667, %v1676
  %v1680 = vsub.f32 %v1672, %v1678
  %v1681 = vmul.f32 %v1679, 1.442695
  %v1682 = vpow.pop %v1681
  %v1683 = vmul.f32 %v1680, 1.442695
  %v1684 = vpow.pop %v1683
  %1685 = vmatprep.subr.mxu0 0.0
  %1686 = vmatpush1.msra.mxu0 %v1530
  %1687 = vmatprep.subr.mxu0 0.0
  %1688 = vmatpush1.msra.mxu0 %v1531
  %1689 = vmatprep.subr.mxu0 0.0
  %1690 = vmatpush1.msra.mxu0 %v1532
  %1691 = vmatprep.subr.mxu0 0.0
  %1692 = vmatpush1.msra.mxu0 %v1533
  %1693 = vmatprep.subr.mxu0 0.0
  %1694 = vmatpush1.msra.mxu0 %v1534
  %1695 = vmatprep.subr.mxu0 0.0
  %1696 = vmatpush1.msra.mxu0 %v1535
  %1697 = vmatprep.subr.mxu0 0.0
  %1698 = vmatpush1.msra.mxu0 %v1536
  %1699 = vmatprep.subr.mxu0 0.0
  %1700 = vmatpush1.msra.mxu0 %v1537
  %1701 = vmatprep.subr.mxu0 0.0
  %1702 = vmatpush1.msra.mxu0 %v1538
  %1703 = vmatprep.subr.mxu0 0.0
  %1704 = vmatpush1.msra.mxu0 %v1539
  %1705 = vmatprep.subr.mxu0 0.0
  %1706 = vmatpush1.msra.mxu0 %v1540
  %1707 = vmatprep.subr.mxu0 0.0
  %1708 = vmatpush1.msra.mxu0 %v1541
  %1709 = vmatprep.subr.mxu0 0.0
  %1710 = vmatpush1.msra.mxu0 %v1542
  %1711 = vmatprep.subr.mxu0 0.0
  %1712 = vmatpush1.msra.mxu0 %v1543
  %1713 = vmatprep.subr.mxu0 0.0
  %1714 = vmatpush1.msra.mxu0 %v1544
  %1715 = vmatprep.subr.mxu0 0.0
  %1716 = vmatpush1.msra.mxu0 %v1545
  %1717 = vmatprep.subr.mxu0 0.0
  %1718 = vmatpush1.msra.mxu0 0.0
  %1719 = vmatprep.subr.mxu0 0.0
  %1720 = vmatpush1.msra.mxu0 0.0
  %1721 = vmatprep.subr.mxu0 0.0
  %1722 = vmatpush1.msra.mxu0 0.0
  %1723 = vmatprep.subr.mxu0 0.0
  %1724 = vmatpush1.msra.mxu0 0.0
  %1725 = vmatprep.subr.mxu0 0.0
  %1726 = vmatpush1.msra.mxu0 0.0
  %1727 = vmatprep.subr.mxu0 0.0
  %1728 = vmatpush1.msra.mxu0 0.0
  %1729 = vmatprep.subr.mxu0 0.0
  %1730 = vmatpush1.msra.mxu0 0.0
  %1731 = vmatprep.subr.mxu0 0.0
  %1732 = vmatpush1.msra.mxu0 0.0
  %1733 = vmatprep.subr.mxu0 0.0
  %1734 = vmatpush1.msra.mxu0 0.0
  %1735 = vmatprep.subr.mxu0 0.0
  %1736 = vmatpush1.msra.mxu0 0.0
  %1737 = vmatprep.subr.mxu0 0.0
  %1738 = vmatpush1.msra.mxu0 0.0
  %1739 = vmatprep.subr.mxu0 0.0
  %1740 = vmatpush1.msra.mxu0 0.0
  %1741 = vmatprep.subr.mxu0 0.0
  %1742 = vmatpush1.msra.mxu0 0.0
  %1743 = vmatprep.subr.mxu0 0.0
  %1744 = vmatpush1.msra.mxu0 0.0
  %1745 = vmatprep.subr.mxu0 0.0
  %1746 = vmatpush1.msra.mxu0 0.0
  %1747 = vmatprep.subr.mxu0 0.0
  %1748 = vmatpush1.msra.mxu0 0.0
  %1749 = vmatprep.mubr.f32.mxu0 0.0
  %1750 = vmatmul.mubr.f32.gmra.mrb[0].mxu0 %v1682
  %v1751 = vpop.f32.mrb[0].mxu0
  %v1752 = vadd.f32 0.0, %v1751
  %v1753 = vpop.f32.mrb[0].mxu0
  %1754 = vmatprep.mubr.f32.mxu0 0.0
  %1755 = vmatmul.mubr.f32.gmra.mrb[0].mxu0 %v1684
  %v1756 = vpop.f32.mrb[0].mxu0
  %v1757 = vadd.f32 0.0, %v1756
  %v1758 = vpop.f32.mrb[0].mxu0
  %1759 = vdwg.mxu0
  %1760 = vmatprep.subr.mxu0 0.0
  %1761 = vmatpush1.msra.mxu0 %v210
  %1762 = vmatprep.subr.mxu0 0.0
  %1763 = vmatpush1.msra.mxu0 %v211
  %1764 = vmatprep.subr.mxu0 0.0
  %1765 = vmatpush1.msra.mxu0 %v212
  %1766 = vmatprep.subr.mxu0 0.0
  %1767 = vmatpush1.msra.mxu0 %v213
  %1768 = vmatprep.subr.mxu0 0.0
  %1769 = vmatpush1.msra.mxu0 %v214
  %1770 = vmatprep.subr.mxu0 0.0
  %1771 = vmatpush1.msra.mxu0 %v215
  %1772 = vmatprep.subr.mxu0 0.0
  %1773 = vmatpush1.msra.mxu0 %v216
  %1774 = vmatprep.subr.mxu0 0.0
  %1775 = vmatpush1.msra.mxu0 %v217
  %1776 = vmatprep.subr.mxu0 0.0
  %1777 = vmatpush1.msra.mxu0 %v218
  %1778 = vmatprep.subr.mxu0 0.0
  %1779 = vmatpush1.msra.mxu0 %v219
  %1780 = vmatprep.subr.mxu0 0.0
  %1781 = vmatpush1.msra.mxu0 %v220
  %1782 = vmatprep.subr.mxu0 0.0
  %1783 = vmatpush1.msra.mxu0 %v221
  %1784 = vmatprep.subr.mxu0 0.0
  %1785 = vmatpush1.msra.mxu0 %v222
  %1786 = vmatprep.subr.mxu0 0.0
  %1787 = vmatpush1.msra.mxu0 %v223
  %1788 = vmatprep.subr.mxu0 0.0
  %1789 = vmatpush1.msra.mxu0 %v224
  %1790 = vmatprep.subr.mxu0 0.0
  %1791 = vmatpush1.msra.mxu0 %v225
  %1792 = vmatprep.subr.mxu0 0.0
  %1793 = vmatpush1.msra.mxu0 0.0
  %1794 = vmatprep.subr.mxu0 0.0
  %1795 = vmatpush1.msra.mxu0 0.0
  %1796 = vmatprep.subr.mxu0 0.0
  %1797 = vmatpush1.msra.mxu0 0.0
  %1798 = vmatprep.subr.mxu0 0.0
  %1799 = vmatpush1.msra.mxu0 0.0
  %1800 = vmatprep.subr.mxu0 0.0
  %1801 = vmatpush1.msra.mxu0 0.0
  %1802 = vmatprep.subr.mxu0 0.0
  %1803 = vmatpush1.msra.mxu0 0.0
  %1804 = vmatprep.subr.mxu0 0.0
  %1805 = vmatpush1.msra.mxu0 0.0
  %1806 = vmatprep.subr.mxu0 0.0
  %1807 = vmatpush1.msra.mxu0 0.0
  %1808 = vmatprep.subr.mxu0 0.0
  %1809 = vmatpush1.msra.mxu0 0.0
  %1810 = vmatprep.subr.mxu0 0.0
  %1811 = vmatpush1.msra.mxu0 0.0
  %1812 = vmatprep.subr.mxu0 0.0
  %1813 = vmatpush1.msra.mxu0 0.0
  %1814 = vmatprep.subr.mxu0 0.0
  %1815 = vmatpush1.msra.mxu0 0.0
  %1816 = vmatprep.subr.mxu0 0.0
  %1817 = vmatpush1.msra.mxu0 0.0
  %1818 = vmatprep.subr.mxu0 0.0
  %1819 = vmatpush1.msra.mxu0 0.0
  %1820 = vmatprep.subr.mxu0 0.0
  %1821 = vmatpush1.msra.mxu0 0.0
  %1822 = vmatprep.subr.mxu0 0.0
  %1823 = vmatpush1.msra.mxu0 0.0
  %1824 = vmatprep.mubr.f32.mxu0 0.0
  %1825 = vmatmul.mubr.f32.gmra.mrb[0].mxu0 %v1682
  %v1826 = vpop.f32.mrb[0].mxu0
  %v1827 = vadd.f32 0.0, %v1826
  %v1828 = vpop.f32.mrb[0].mxu0
  %1829 = vmatprep.mubr.f32.mxu0 0.0
  %1830 = vmatmul.mubr.f32.gmra.mrb[0].mxu0 %v1684
  %v1831 = vpop.f32.mrb[0].mxu0
  %v1832 = vadd.f32 0.0, %v1831
  %v1833 = vpop.f32.mrb[0].mxu0
  %1834 = vdwg.mxu0
  %v1835 = vrcp.pop %v1827
  %v1836 = vrcp.pop %v1832
  %v1837 = vmul.f32 %v1752, %v1835
  %v1838 = vmul.f32 %v1757, %v1836
  %s1839 = scalar_lea.vmem %s9, 48
  %v1840 = vld [vmem:[%s1839] sm:$0xff]
  %v1841 = vld [vmem:[%s1839 + $0x8] sm:$0xff]
  %v1842 = vld [vmem:[%s1839 + $0x10] sm:$0xff]
  %v1843 = vld [vmem:[%s1839 + $0x18] sm:$0xff]
  %v1844 = vld [vmem:[%s1839 + $0x20] sm:$0xff]
  %v1845 = vld [vmem:[%s1839 + $0x28] sm:$0xff]
  %v1847 = vsel %vm228, %v1837, 0
  %v1850 = vsel %vm228, %v1838, 0
  %1852 = vmatprep.subr.mxu0 0.0
  %1853 = vmatpush1.msra.mxu0 %v1840
  %1854 = vmatprep.subr.mxu0 0.0
  %1855 = vmatpush1.msra.mxu0 %v1841
  %1856 = vmatprep.subr.mxu0 0.0
  %1857 = vmatpush1.msra.mxu0 %v1842
  %1858 = vmatprep.subr.mxu0 0.0
  %1859 = vmatpush1.msra.mxu0 %v1843
  %1860 = vmatprep.subr.mxu0 0.0
  %1861 = vmatpush1.msra.mxu0 %v1844
  %1862 = vmatprep.subr.mxu0 0.0
  %1863 = vmatpush1.msra.mxu0 %v1845
  %1864 = vmatprep.subr.mxu0 0.0
  %1865 = vmatpush1.msra.mxu0 0.0
  %1866 = vmatprep.subr.mxu0 0.0
  %1867 = vmatpush1.msra.mxu0 0.0
  %1868 = vmatprep.subr.mxu0 0.0
  %1869 = vmatpush1.msra.mxu0 0.0
  %1870 = vmatprep.subr.mxu0 0.0
  %1871 = vmatpush1.msra.mxu0 0.0
  %1872 = vmatprep.subr.mxu0 0.0
  %1873 = vmatpush1.msra.mxu0 0.0
  %1874 = vmatprep.subr.mxu0 0.0
  %1875 = vmatpush1.msra.mxu0 0.0
  %1876 = vmatprep.subr.mxu0 0.0
  %1877 = vmatpush1.msra.mxu0 0.0
  %1878 = vmatprep.subr.mxu0 0.0
  %1879 = vmatpush1.msra.mxu0 0.0
  %1880 = vmatprep.subr.mxu0 0.0
  %1881 = vmatpush1.msra.mxu0 0.0
  %1882 = vmatprep.subr.mxu0 0.0
  %1883 = vmatpush1.msra.mxu0 0.0
  %1884 = vmatprep.subr.mxu0 0.0
  %1885 = vmatpush1.msra.mxu0 0.0
  %1886 = vmatprep.subr.mxu0 0.0
  %1887 = vmatpush1.msra.mxu0 0.0
  %1888 = vmatprep.subr.mxu0 0.0
  %1889 = vmatpush1.msra.mxu0 0.0
  %1890 = vmatprep.subr.mxu0 0.0
  %1891 = vmatpush1.msra.mxu0 0.0
  %1892 = vmatprep.subr.mxu0 0.0
  %1893 = vmatpush1.msra.mxu0 0.0
  %1894 = vmatprep.subr.mxu0 0.0
  %1895 = vmatpush1.msra.mxu0 0.0
  %1896 = vmatprep.subr.mxu0 0.0
  %1897 = vmatpush1.msra.mxu0 0.0
  %1898 = vmatprep.subr.mxu0 0.0
  %1899 = vmatpush1.msra.mxu0 0.0
  %1900 = vmatprep.subr.mxu0 0.0
  %1901 = vmatpush1.msra.mxu0 0.0
  %1902 = vmatprep.subr.mxu0 0.0
  %1903 = vmatpush1.msra.mxu0 0.0
  %1904 = vmatprep.subr.mxu0 0.0
  %1905 = vmatpush1.msra.mxu0 0.0
  %1906 = vmatprep.subr.mxu0 0.0
  %1907 = vmatpush1.msra.mxu0 0.0
  %1908 = vmatprep.subr.mxu0 0.0
  %1909 = vmatpush1.msra.mxu0 0.0
  %1910 = vmatprep.subr.mxu0 0.0
  %1911 = vmatpush1.msra.mxu0 0.0
  %1912 = vmatprep.subr.mxu0 0.0
  %1913 = vmatpush1.msra.mxu0 0.0
  %1914 = vmatprep.subr.mxu0 0.0
  %1915 = vmatpush1.msra.mxu0 0.0
  %1916 = vmatprep.mubr.f32.mxu0 0.0
  %1917 = vmatmul.mubr.f32.gmra.mrb[0].mxu0 %v1847
  %v1918 = vpop.f32.mrb[0].mxu0
  %v1919 = vadd.f32 0.0, %v1918
  %v1920 = vpop.f32.mrb[0].mxu0
  %1921 = vmatprep.mubr.f32.mxu0 0.0
  %1922 = vmatmul.mubr.f32.gmra.mrb[0].mxu0 %v1850
  %v1923 = vpop.f32.mrb[0].mxu0
  %v1924 = vadd.f32 0.0, %v1923
  %v1925 = vpop.f32.mrb[0].mxu0
  %1926 = vdwg.mxu0
  %v1927 = vadd.f32 %v1214, %v1919
  %v1928 = vadd.f32 %v1215, %v1924
  %s1929 = scalar_lea.vmem %s10, 1
  %v1930 = vld [vmem:[%s1929] sm:$0x1]
  %v1932 = vlaneseq
  %v1933 = vshrl.u32 %v1932, 7
  %v1934 = vsub.s32 0, %v1933
  %v1935 = vrot.slane %v1930, %v1934
  %v1937 = vadd.f32 %v1927, %v1935
  %v1938 = vadd.f32 %v1928, %v1935
  %s1939 = scalar_lea.vmem %s11, 1
  %v1940 = vld [vmem:[%s1939] sm:$0x1]
  %s1941 = scalar_lea.vmem %s12, 1
  %v1942 = vld [vmem:[%s1941] sm:$0x1]
  %v1943 = vsel %vm228, %v1937, 0.0
  %1944 = vadd.xlane.f32.xlu0 %v1943
  %v1945 = vpop.xlane.xlu0 %1944
  %v1946 = vsel %vm228, %v1938, 0.0
  %1947 = vadd.xlane.f32.xlu0 %v1946
  %v1948 = vpop.xlane.xlu0 %1947
  %v1949 = vmul.f32 %v1945, %v235
  %v1950 = vmul.f32 %v1948, %v235
  %v1951 = vsub.f32 %v1937, %v1949
  %v1952 = vsub.f32 %v1938, %v1950
  %v1953 = vmul.f32 %v1951, %v1951
  %v1954 = vmul.f32 %v1952, %v1952
  %v1955 = vsel %vm228, %v1953, 0.0
  %1956 = vadd.xlane.f32.xlu0 %v1955
  %v1957 = vpop.xlane.xlu0 %1956
  %v1958 = vsel %vm228, %v1954, 0.0
  %1959 = vadd.xlane.f32.xlu0 %v1958
  %v1960 = vpop.xlane.xlu0 %1959
  %v1961 = vmul.f32 %v1957, %v235
  %v1962 = vmul.f32 %v1960, %v235
  %v1963 = vadd.f32 %v1961, 1e-05
  %v1964 = vadd.f32 %v1962, 1e-05
  %v1965 = vrsqrt.pop %v1963
  %v1966 = vrsqrt.pop %v1964
  %v1967 = vmul.f32 %v1951, %v1965
  %v1968 = vmul.f32 %v1952, %v1966
  %v1970 = vlaneseq
  %v1971 = vshrl.u32 %v1970, 7
  %v1972 = vsub.s32 0, %v1971
  %v1973 = vrot.slane %v1940, %v1972
  %v1975 = vmul.f32 %v1967, %v1973
  %v1976 = vmul.f32 %v1968, %v1973
  %v1978 = vlaneseq
  %v1979 = vshrl.u32 %v1978, 7
  %v1980 = vsub.s32 0, %v1979
  %v1981 = vrot.slane %v1942, %v1980
  %v1983 = vadd.f32 %v1975, %v1981
  %v1984 = vadd.f32 %v1976, %v1981
  %s1985 = scalar_lea.vmem %s13, 96
  %v1986 = vld [vmem:[%s1985] sm:$0xff]
  %v1987 = vld [vmem:[%s1985 + $0x8] sm:$0xff]
  %v1988 = vld [vmem:[%s1985 + $0x10] sm:$0xff]
  %v1989 = vld [vmem:[%s1985 + $0x18] sm:$0xff]
  %v1990 = vld [vmem:[%s1985 + $0x20] sm:$0xff]
  %v1991 = vld [vmem:[%s1985 + $0x28] sm:$0xff]
  %v1992 = vld [vmem:[%s1985 + $0x30] sm:$0xff]
  %v1993 = vld [vmem:[%s1985 + $0x38] sm:$0xff]
  %v1994 = vld [vmem:[%s1985 + $0x40] sm:$0xff]
  %v1995 = vld [vmem:[%s1985 + $0x48] sm:$0xff]
  %v1996 = vld [vmem:[%s1985 + $0x50] sm:$0xff]
  %v1997 = vld [vmem:[%s1985 + $0x58] sm:$0xff]
  %s1998 = scalar_lea.vmem %s14, 2
  %v1999 = vld [vmem:[%s1998] sm:$0x3]
  %v2001 = vlaneseq
  %v2002 = vshrl.u32 %v2001, 7
  %v2003 = vsub.s32 0, %v2002
  %v2004 = vrot.slane %v1999, %v2003
  %v2005 = vlaneseq
  %v2006 = vshrl.u32 %v2005, 7
  %v2007 = vsub.s32 1, %v2006
  %v2008 = vrot.slane %v1999, %v2007
  %v2012 = vsel %vm228, %v1983, 0
  %v2015 = vsel %vm228, %v1984, 0
  %2017 = vmatprep.subr.mxu0 %v1987
  %2018 = vmatpush1.msra.mxu0 %v1986
  %2019 = vmatprep.subr.mxu0 %v1989
  %2020 = vmatpush1.msra.mxu0 %v1988
  %2021 = vmatprep.subr.mxu0 %v1991
  %2022 = vmatpush1.msra.mxu0 %v1990
  %2023 = vmatprep.subr.mxu0 %v1993
  %2024 = vmatpush1.msra.mxu0 %v1992
  %2025 = vmatprep.subr.mxu0 %v1995
  %2026 = vmatpush1.msra.mxu0 %v1994
  %2027 = vmatprep.subr.mxu0 %v1997
  %2028 = vmatpush1.msra.mxu0 %v1996
  %2029 = vmatprep.subr.mxu0 0.0
  %2030 = vmatpush1.msra.mxu0 0.0
  %2031 = vmatprep.subr.mxu0 0.0
  %2032 = vmatpush1.msra.mxu0 0.0
  %2033 = vmatprep.subr.mxu0 0.0
  %2034 = vmatpush1.msra.mxu0 0.0
  %2035 = vmatprep.subr.mxu0 0.0
  %2036 = vmatpush1.msra.mxu0 0.0
  %2037 = vmatprep.subr.mxu0 0.0
  %2038 = vmatpush1.msra.mxu0 0.0
  %2039 = vmatprep.subr.mxu0 0.0
  %2040 = vmatpush1.msra.mxu0 0.0
  %2041 = vmatprep.subr.mxu0 0.0
  %2042 = vmatpush1.msra.mxu0 0.0
  %2043 = vmatprep.subr.mxu0 0.0
  %2044 = vmatpush1.msra.mxu0 0.0
  %2045 = vmatprep.subr.mxu0 0.0
  %2046 = vmatpush1.msra.mxu0 0.0
  %2047 = vmatprep.subr.mxu0 0.0
  %2048 = vmatpush1.msra.mxu0 0.0
  %2049 = vmatprep.subr.mxu0 0.0
  %2050 = vmatpush1.msra.mxu0 0.0
  %2051 = vmatprep.subr.mxu0 0.0
  %2052 = vmatpush1.msra.mxu0 0.0
  %2053 = vmatprep.subr.mxu0 0.0
  %2054 = vmatpush1.msra.mxu0 0.0
  %2055 = vmatprep.subr.mxu0 0.0
  %2056 = vmatpush1.msra.mxu0 0.0
  %2057 = vmatprep.subr.mxu0 0.0
  %2058 = vmatpush1.msra.mxu0 0.0
  %2059 = vmatprep.subr.mxu0 0.0
  %2060 = vmatpush1.msra.mxu0 0.0
  %2061 = vmatprep.subr.mxu0 0.0
  %2062 = vmatpush1.msra.mxu0 0.0
  %2063 = vmatprep.subr.mxu0 0.0
  %2064 = vmatpush1.msra.mxu0 0.0
  %2065 = vmatprep.subr.mxu0 0.0
  %2066 = vmatpush1.msra.mxu0 0.0
  %2067 = vmatprep.subr.mxu0 0.0
  %2068 = vmatpush1.msra.mxu0 0.0
  %2069 = vmatprep.subr.mxu0 0.0
  %2070 = vmatpush1.msra.mxu0 0.0
  %2071 = vmatprep.subr.mxu0 0.0
  %2072 = vmatpush1.msra.mxu0 0.0
  %2073 = vmatprep.subr.mxu0 0.0
  %2074 = vmatpush1.msra.mxu0 0.0
  %2075 = vmatprep.subr.mxu0 0.0
  %2076 = vmatpush1.msra.mxu0 0.0
  %2077 = vmatprep.subr.mxu0 0.0
  %2078 = vmatpush1.msra.mxu0 0.0
  %2079 = vmatprep.subr.mxu0 0.0
  %2080 = vmatpush1.msra.mxu0 0.0
  %2081 = vmatprep.mubr.f32.mxu0 0.0
  %2082 = vmatmul.mubr.f32.gmra.mrb[0].mxu0 %v2012
  %v2083 = vpop.f32.mrb[0].mxu0
  %v2084 = vadd.f32 %v2004, %v2083
  %v2085 = vpop.f32.mrb[0].mxu0
  %v2086 = vadd.f32 %v2008, %v2085
  %2087 = vmatprep.mubr.f32.mxu0 0.0
  %2088 = vmatmul.mubr.f32.gmra.mrb[0].mxu0 %v2015
  %v2089 = vpop.f32.mrb[0].mxu0
  %v2090 = vadd.f32 %v2004, %v2089
  %v2091 = vpop.f32.mrb[0].mxu0
  %v2092 = vadd.f32 %v2008, %v2091
  %2093 = vdwg.mxu0
  %v2094 = vmax.f32 %v2084, 0.0
  %v2095 = vmax.f32 %v2086, 0.0
  %v2096 = vmax.f32 %v2090, 0.0
  %v2097 = vmax.f32 %v2092, 0.0
  %s2098 = scalar_lea.vmem %s15, 192
  %v2099 = vld [vmem:[%s2098] sm:$0xff]
  %v2100 = vld [vmem:[%s2098 + $0x8] sm:$0xff]
  %v2101 = vld [vmem:[%s2098 + $0x10] sm:$0xff]
  %v2102 = vld [vmem:[%s2098 + $0x18] sm:$0xff]
  %v2103 = vld [vmem:[%s2098 + $0x20] sm:$0xff]
  %v2104 = vld [vmem:[%s2098 + $0x28] sm:$0xff]
  %v2105 = vld [vmem:[%s2098 + $0x30] sm:$0xff]
  %v2106 = vld [vmem:[%s2098 + $0x38] sm:$0xff]
  %v2107 = vld [vmem:[%s2098 + $0x40] sm:$0xff]
  %v2108 = vld [vmem:[%s2098 + $0x48] sm:$0xff]
  %v2109 = vld [vmem:[%s2098 + $0x50] sm:$0xff]
  %v2110 = vld [vmem:[%s2098 + $0x58] sm:$0xff]
  %v2111 = vld [vmem:[%s2098 + $0x60] sm:$0xff]
  %v2112 = vld [vmem:[%s2098 + $0x68] sm:$0xff]
  %v2113 = vld [vmem:[%s2098 + $0x70] sm:$0xff]
  %v2114 = vld [vmem:[%s2098 + $0x78] sm:$0xff]
  %v2115 = vld [vmem:[%s2098 + $0x80] sm:$0xff]
  %v2116 = vld [vmem:[%s2098 + $0x88] sm:$0xff]
  %v2117 = vld [vmem:[%s2098 + $0x90] sm:$0xff]
  %v2118 = vld [vmem:[%s2098 + $0x98] sm:$0xff]
  %v2119 = vld [vmem:[%s2098 + $0xa0] sm:$0xff]
  %v2120 = vld [vmem:[%s2098 + $0xa8] sm:$0xff]
  %v2121 = vld [vmem:[%s2098 + $0xb0] sm:$0xff]
  %v2122 = vld [vmem:[%s2098 + $0xb8] sm:$0xff]
  %v2124 = vsel %vm1123, %v2095, 0
  %v2127 = vsel %vm1123, %v2097, 0
  %2129 = vmatprep.subr.mxu0 0.0
  %2130 = vmatpush1.msra.mxu0 %v2099
  %2131 = vmatprep.subr.mxu0 0.0
  %2132 = vmatpush1.msra.mxu0 %v2100
  %2133 = vmatprep.subr.mxu0 0.0
  %2134 = vmatpush1.msra.mxu0 %v2101
  %2135 = vmatprep.subr.mxu0 0.0
  %2136 = vmatpush1.msra.mxu0 %v2102
  %2137 = vmatprep.subr.mxu0 0.0
  %2138 = vmatpush1.msra.mxu0 %v2103
  %2139 = vmatprep.subr.mxu0 0.0
  %2140 = vmatpush1.msra.mxu0 %v2104
  %2141 = vmatprep.subr.mxu0 0.0
  %2142 = vmatpush1.msra.mxu0 %v2105
  %2143 = vmatprep.subr.mxu0 0.0
  %2144 = vmatpush1.msra.mxu0 %v2106
  %2145 = vmatprep.subr.mxu0 0.0
  %2146 = vmatpush1.msra.mxu0 %v2107
  %2147 = vmatprep.subr.mxu0 0.0
  %2148 = vmatpush1.msra.mxu0 %v2108
  %2149 = vmatprep.subr.mxu0 0.0
  %2150 = vmatpush1.msra.mxu0 %v2109
  %2151 = vmatprep.subr.mxu0 0.0
  %2152 = vmatpush1.msra.mxu0 %v2110
  %2153 = vmatprep.subr.mxu0 0.0
  %2154 = vmatpush1.msra.mxu0 %v2111
  %2155 = vmatprep.subr.mxu0 0.0
  %2156 = vmatpush1.msra.mxu0 %v2112
  %2157 = vmatprep.subr.mxu0 0.0
  %2158 = vmatpush1.msra.mxu0 %v2113
  %2159 = vmatprep.subr.mxu0 0.0
  %2160 = vmatpush1.msra.mxu0 %v2114
  %2161 = vmatprep.subr.mxu0 0.0
  %2162 = vmatpush1.msra.mxu0 %v2115
  %2163 = vmatprep.subr.mxu0 0.0
  %2164 = vmatpush1.msra.mxu0 %v2116
  %2165 = vmatprep.subr.mxu0 0.0
  %2166 = vmatpush1.msra.mxu0 %v2117
  %2167 = vmatprep.subr.mxu0 0.0
  %2168 = vmatpush1.msra.mxu0 %v2118
  %2169 = vmatprep.subr.mxu0 0.0
  %2170 = vmatpush1.msra.mxu0 %v2119
  %2171 = vmatprep.subr.mxu0 0.0
  %2172 = vmatpush1.msra.mxu0 %v2120
  %2173 = vmatprep.subr.mxu0 0.0
  %2174 = vmatpush1.msra.mxu0 %v2121
  %2175 = vmatprep.subr.mxu0 0.0
  %2176 = vmatpush1.msra.mxu0 %v2122
  %2177 = vmatprep.subr.mxu0 0.0
  %2178 = vmatpush1.msra.mxu0 0.0
  %2179 = vmatprep.subr.mxu0 0.0
  %2180 = vmatpush1.msra.mxu0 0.0
  %2181 = vmatprep.subr.mxu0 0.0
  %2182 = vmatpush1.msra.mxu0 0.0
  %2183 = vmatprep.subr.mxu0 0.0
  %2184 = vmatpush1.msra.mxu0 0.0
  %2185 = vmatprep.subr.mxu0 0.0
  %2186 = vmatpush1.msra.mxu0 0.0
  %2187 = vmatprep.subr.mxu0 0.0
  %2188 = vmatpush1.msra.mxu0 0.0
  %2189 = vmatprep.subr.mxu0 0.0
  %2190 = vmatpush1.msra.mxu0 0.0
  %2191 = vmatprep.subr.mxu0 0.0
  %2192 = vmatpush1.msra.mxu0 0.0
  %2193 = vmatprep.mubr.f32.mxu0 %v2124
  %2194 = vmatmul.mubr.f32.gmra.mrb[0].mxu0 %v2094
  %v2195 = vpop.f32.mrb[0].mxu0
  %v2196 = vadd.f32 0.0, %v2195
  %v2197 = vpop.f32.mrb[0].mxu0
  %2198 = vmatprep.mubr.f32.mxu0 %v2127
  %2199 = vmatmul.mubr.f32.gmra.mrb[0].mxu0 %v2096
  %v2200 = vpop.f32.mrb[0].mxu0
  %v2201 = vadd.f32 0.0, %v2200
  %v2202 = vpop.f32.mrb[0].mxu0
  %2203 = vdwg.mxu0
  %v2204 = vadd.f32 %v1937, %v2196
  %v2205 = vadd.f32 %v1938, %v2201
  %s2206 = scalar_lea.vmem %s16, 1
  %v2207 = vld [vmem:[%s2206] sm:$0x1]
  %v2209 = vlaneseq
  %v2210 = vshrl.u32 %v2209, 7
  %v2211 = vsub.s32 0, %v2210
  %v2212 = vrot.slane %v2207, %v2211
  %v2214 = vadd.f32 %v2204, %v2212
  %v2215 = vadd.f32 %v2205, %v2212
  %v2216 = vld [vmem:[%s17] sm:$0x1]
  %v2217 = vld [vmem:[%s18] sm:$0x1]
  %v2218 = vsel %vm228, %v2214, 0.0
  %2219 = vadd.xlane.f32.xlu0 %v2218
  %v2220 = vpop.xlane.xlu0 %2219
  %v2221 = vsel %vm228, %v2215, 0.0
  %2222 = vadd.xlane.f32.xlu0 %v2221
  %v2223 = vpop.xlane.xlu0 %2222
  %v2224 = vmul.f32 %v2220, %v235
  %v2225 = vmul.f32 %v2223, %v235
  %v2226 = vsub.f32 %v2214, %v2224
  %v2227 = vsub.f32 %v2215, %v2225
  %v2228 = vmul.f32 %v2226, %v2226
  %v2229 = vmul.f32 %v2227, %v2227
  %v2230 = vsel %vm228, %v2228, 0.0
  %2231 = vadd.xlane.f32.xlu0 %v2230
  %v2232 = vpop.xlane.xlu0 %2231
  %v2233 = vsel %vm228, %v2229, 0.0
  %2234 = vadd.xlane.f32.xlu0 %v2233
  %v2235 = vpop.xlane.xlu0 %2234
  %v2236 = vmul.f32 %v2232, %v235
  %v2237 = vmul.f32 %v2235, %v235
  %v2238 = vadd.f32 %v2236, 1e-05
  %v2239 = vadd.f32 %v2237, 1e-05
  %v2240 = vrsqrt.pop %v2238
  %v2241 = vrsqrt.pop %v2239
  %v2242 = vmul.f32 %v2226, %v2240
  %v2243 = vmul.f32 %v2227, %v2241
  %v2245 = vlaneseq
  %v2246 = vshrl.u32 %v2245, 7
  %v2247 = vsub.s32 0, %v2246
  %v2248 = vrot.slane %v2216, %v2247
  %v2250 = vmul.f32 %v2242, %v2248
  %v2251 = vmul.f32 %v2243, %v2248
  %v2253 = vlaneseq
  %v2254 = vshrl.u32 %v2253, 7
  %v2255 = vsub.s32 0, %v2254
  %v2256 = vrot.slane %v2217, %v2255
  %v2258 = vadd.f32 %v2250, %v2256
  %v2259 = vadd.f32 %v2251, %v2256
  %v2260 = vld [vmem:[%s19] sm:$0xff]
  %v2261 = vld [vmem:[%s19 + $0x8] sm:$0xff]
  %v2262 = vld [vmem:[%s19 + $0x10] sm:$0xff]
  %v2263 = vld [vmem:[%s19 + $0x18] sm:$0xff]
  %v2264 = vld [vmem:[%s19 + $0x20] sm:$0xff]
  %v2265 = vld [vmem:[%s19 + $0x28] sm:$0xff]
  %v2266 = vld [vmem:[%s20] sm:$0x1]
  %v2268 = vlaneseq
  %v2269 = vshrl.u32 %v2268, 7
  %v2270 = vsub.s32 0, %v2269
  %v2271 = vrot.slane %v2266, %v2270
  %v2274 = vsel %vm228, %v2258, 0
  %v2277 = vsel %vm228, %v2259, 0
  %2279 = vmatprep.subr.mxu0 0.0
  %2280 = vmatpush1.msra.mxu0 %v2260
  %2281 = vmatprep.subr.mxu0 0.0
  %2282 = vmatpush1.msra.mxu0 %v2261
  %2283 = vmatprep.subr.mxu0 0.0
  %2284 = vmatpush1.msra.mxu0 %v2262
  %2285 = vmatprep.subr.mxu0 0.0
  %2286 = vmatpush1.msra.mxu0 %v2263
  %2287 = vmatprep.subr.mxu0 0.0
  %2288 = vmatpush1.msra.mxu0 %v2264
  %2289 = vmatprep.subr.mxu0 0.0
  %2290 = vmatpush1.msra.mxu0 %v2265
  %2291 = vmatprep.subr.mxu0 0.0
  %2292 = vmatpush1.msra.mxu0 0.0
  %2293 = vmatprep.subr.mxu0 0.0
  %2294 = vmatpush1.msra.mxu0 0.0
  %2295 = vmatprep.subr.mxu0 0.0
  %2296 = vmatpush1.msra.mxu0 0.0
  %2297 = vmatprep.subr.mxu0 0.0
  %2298 = vmatpush1.msra.mxu0 0.0
  %2299 = vmatprep.subr.mxu0 0.0
  %2300 = vmatpush1.msra.mxu0 0.0
  %2301 = vmatprep.subr.mxu0 0.0
  %2302 = vmatpush1.msra.mxu0 0.0
  %2303 = vmatprep.subr.mxu0 0.0
  %2304 = vmatpush1.msra.mxu0 0.0
  %2305 = vmatprep.subr.mxu0 0.0
  %2306 = vmatpush1.msra.mxu0 0.0
  %2307 = vmatprep.subr.mxu0 0.0
  %2308 = vmatpush1.msra.mxu0 0.0
  %2309 = vmatprep.subr.mxu0 0.0
  %2310 = vmatpush1.msra.mxu0 0.0
  %2311 = vmatprep.subr.mxu0 0.0
  %2312 = vmatpush1.msra.mxu0 0.0
  %2313 = vmatprep.subr.mxu0 0.0
  %2314 = vmatpush1.msra.mxu0 0.0
  %2315 = vmatprep.subr.mxu0 0.0
  %2316 = vmatpush1.msra.mxu0 0.0
  %2317 = vmatprep.subr.mxu0 0.0
  %2318 = vmatpush1.msra.mxu0 0.0
  %2319 = vmatprep.subr.mxu0 0.0
  %2320 = vmatpush1.msra.mxu0 0.0
  %2321 = vmatprep.subr.mxu0 0.0
  %2322 = vmatpush1.msra.mxu0 0.0
  %2323 = vmatprep.subr.mxu0 0.0
  %2324 = vmatpush1.msra.mxu0 0.0
  %2325 = vmatprep.subr.mxu0 0.0
  %2326 = vmatpush1.msra.mxu0 0.0
  %2327 = vmatprep.subr.mxu0 0.0
  %2328 = vmatpush1.msra.mxu0 0.0
  %2329 = vmatprep.subr.mxu0 0.0
  %2330 = vmatpush1.msra.mxu0 0.0
  %2331 = vmatprep.subr.mxu0 0.0
  %2332 = vmatpush1.msra.mxu0 0.0
  %2333 = vmatprep.subr.mxu0 0.0
  %2334 = vmatpush1.msra.mxu0 0.0
  %2335 = vmatprep.subr.mxu0 0.0
  %2336 = vmatpush1.msra.mxu0 0.0
  %2337 = vmatprep.subr.mxu0 0.0
  %2338 = vmatpush1.msra.mxu0 0.0
  %2339 = vmatprep.subr.mxu0 0.0
  %2340 = vmatpush1.msra.mxu0 0.0
  %2341 = vmatprep.subr.mxu0 0.0
  %2342 = vmatpush1.msra.mxu0 0.0
  %2343 = vmatprep.mubr.f32.mxu0 0.0
  %2344 = vmatmul.mubr.f32.gmra.mrb[0].mxu0 %v2274
  %v2345 = vpop.f32.mrb[0].mxu0
  %v2346 = vadd.f32 %v2271, %v2345
  %v2347 = vpop.f32.mrb[0].mxu0
  %2348 = vmatprep.mubr.f32.mxu0 0.0
  %2349 = vmatmul.mubr.f32.gmra.mrb[0].mxu0 %v2277
  %v2350 = vpop.f32.mrb[0].mxu0
  %v2351 = vadd.f32 %v2271, %v2350
  %v2352 = vpop.f32.mrb[0].mxu0
  %2353 = vdwg.mxu0
  %2354 = vst [vmem:[%s21] sm:$0xff] %v2346
  %2355 = vst [vmem:[%s21 + $0x8] sm:$0xff] %v2351
  // Predicated region
  $region86: #{bigram_lm_forward.1} parent=0 // pred_check
    _
  $region87: #{bigram_lm_forward.1} parent=0 // pred_check_branch
    %2357 = sbr.rel (0) target = $region89
  $region88: #{bigram_lm_forward.1} parent=0 // pred_region
    _
  $region89: #{bigram_lm_forward.1} parent=0 // pred_fallthru
    _
  // Predicated region
  $region90: #{bigram_lm_forward.1} parent=0 // pred_check
    _
  $region91: #{bigram_lm_forward.1} parent=0 // pred_check_branch
    %2359 = sbr.rel (0) target = $region93
  $region92: #{bigram_lm_forward.1} parent=0 // pred_region
    _
  $region93: #{bigram_lm_forward.1} parent=0 // pred_fallthru
    _

</llo_original>
